<compile_context>
chip_gen: v7x
topology: tpu7x:2x2x1
jax: 0.10.0
libtpu: 0.0.40
codegen_flags: <defaults>
</compile_context>

<pallas_src>
import numpy as np
import jax
import jax.numpy as jnp
from jax.experimental import pallas as pl
from jax.experimental.pallas import tpu as pltpu

EMB_DIM = 32   # args.embedding_dim
VOCAB   = 64   # word_vec (vocabulary size)
SEQ_LEN = 8    # content / cit_content length
BATCH   = 2

E3   = 3 * EMB_DIM      # 96
COLS = E3 + 1           # 97 = conv1 im2col width + bias column

# ---- packed "main" weight slab (MAIN_ROWS x 128 lanes, bf16) ----------------
W2_R,  W2_L  = 0,   0     # rows 0:288,  lanes 0:32   conv2d#2 im2col weight (288,32)
WQ_R,  WQ_L  = 0,  32     # rows 0:97,   lanes 32:64  q_conv1 weight (+bias row 96)
WD_R,  WD_L  = 0,  64     # rows 0:97,   lanes 64:96  d_conv1 weight (+bias row 96)
FC1_R, FC1_L = 0,  96     # rows 0:128,  lanes 96:128 FC1 weight, permuted (128,32)
SEL_R        = 160        # rows 160:176 lanes 32:64  one-hot stride-3 row selector
B2_R         = 192        # row 192      lanes 32:64  conv2d#2 bias
BFC1_R       = 208        # row 208      lanes 32:64  FC1 bias
WFC2_R       = 224        # row 224      lanes 32:64  FC2 weight (as a row)
BFC2_R       = 240        # row 240      lane 32      FC2 bias
MAIN_ROWS    = 288

# ---- packed "wide" banded conv2d#1 weight (bf16) ----------------------------
# output lane = tap*384 + g*32 + c  with conv output width w = 3*g + tap,
# so the 3-wide max-pool over w is three 128-tile-aligned 320-lane slices.
WIDE_ROWS, WIDE_LANES, TAP_STRIDE = 112, 1152, 384


def arcii_kernel(cq_ref, cd_ref, wide_ref, main_ref, out_ref):
    f32 = jnp.float32
    bf16 = jnp.bfloat16
    BT = cq_ref.shape[0] // 8          # samples per grid step
    BT_PAD = out_ref.shape[1]          # 8

    # ---- weight views (hoisted; read once per grid step) ---------------------
    wq   = main_ref[WQ_R:WQ_R + 97, WQ_L:WQ_L + 32]          # (97, 32)
    wd   = main_ref[WD_R:WD_R + 97, WD_L:WD_L + 32]          # (97, 32)
    w2   = main_ref[W2_R:W2_R + 288, W2_L:W2_L + 32]         # (288, 32)
    wfc1 = main_ref[FC1_R:FC1_R + 128, FC1_L:FC1_L + 32]     # (128, 32)
    sel  = main_ref[SEL_R:SEL_R + 16, 32:64]                 # (16, 32)
    b2   = main_ref[B2_R:B2_R + 1, 32:64].astype(f32)        # (1, 32)
    bfc1 = main_ref[BFC1_R:BFC1_R + 1, 32:64].astype(f32)    # (1, 32)
    wfc2 = main_ref[WFC2_R:WFC2_R + 1, 32:64].astype(f32)    # (1, 32)
    bfc2 = main_ref[BFC2_R:BFC2_R + 1, 32:33].astype(f32)    # (1, 1)
    w1b  = wide_ref[0:96, :]                                 # (96, 1152)
    b1r  = wide_ref[96:97, :].astype(f32)                    # (1, 1152)

    # ---- q_conv1 / d_conv1: one fused im2col matmul each (whole block) ------
    conv_q = jnp.dot(cq_ref[...].astype(bf16), wq, preferred_element_type=f32)
    conv_d = jnp.dot(cd_ref[...].astype(bf16), wd, preferred_element_type=f32)

    # ---- match = bmm(conv_content, conv_cit^T) per sample --------------------
    q3t = jnp.swapaxes(conv_q.reshape(BT, 8, 32), 1, 2).astype(bf16)   # (BT,32,8)
    d3  = conv_d.reshape(BT, 8, 32).astype(bf16)                       # (BT,8,32)
    match3 = jnp.einsum('bit,btj->bij', q3t, d3,
                        preferred_element_type=f32)                    # (BT,32,32)

    # ---- first_conv2D: banded matmul, batch-stacked on the M axis ------------
    sh1 = jnp.concatenate([match3[:, 1:, :], jnp.zeros((BT, 1, 32), f32)], axis=1)
    sh2 = jnp.concatenate([match3[:, 2:, :], jnp.zeros((BT, 2, 32), f32)], axis=1)
    mcat = jnp.concatenate([match3, sh1, sh2], axis=2)       # (BT, 32, 96)
    mcat = mcat.reshape(BT * 32, 96).astype(bf16)
    cc = jnp.dot(mcat, w1b, preferred_element_type=f32)      # (BT*32, 1152)
    act = jnp.maximum(cc + b1r, 0.0)

    # MaxPool2d(3,3), w direction: three tile-aligned 320-lane tap blocks
    wp = jnp.maximum(jnp.maximum(act[:, 0:320], act[:, 384:704]), act[:, 768:1088])
    # MaxPool2d(3,3), h direction: sliding max over 3 rows ...
    wp1 = jnp.concatenate([wp[1:], jnp.zeros((1, 320), f32)], axis=0)
    wp2 = jnp.concatenate([wp[2:], jnp.zeros((2, 320), f32)], axis=0)
    hm = jnp.maximum(jnp.maximum(wp, wp1), wp2)              # (BT*32, 320)
    # ... then stride-3 row selection via a one-hot selector (batched matmul)
    hm3 = hm.reshape(BT, 32, 320).astype(bf16)
    selb = jnp.broadcast_to(sel, (BT, 16, 32))
    p1 = jnp.einsum('bjr,brn->bjn', selb, hm3,
                    preferred_element_type=f32)              # (BT,16,320); rows 10..15 = 0

    # ---- second_conv2D: batch-stacked im2col, K = 3*3*32 = 288 ---------------
    p1b = p1.astype(bf16)
    rblk = [p1b[:, kh:kh + 8, :] for kh in range(3)]         # (BT, 8, 320) each
    lhs = jnp.concatenate(
        [jnp.concatenate([rb[:, :, 32 * wo:32 * wo + 96] for rb in rblk],
                         axis=2).reshape(BT * 8, 288)
         for wo in range(6)], axis=0)                        # (6*BT*8, 288)
    c2 = jnp.maximum(jnp.dot(lhs, w2, preferred_element_type=f32) + b2, 0.0)

    # ---- MaxPool2d(3,3): 8x8 -> 2x2 ------------------------------------------
    n = BT * 8
    wcols = [jnp.maximum(
        jnp.maximum(c2[(3 * j) * n:(3 * j + 1) * n, :],
                    c2[(3 * j + 1) * n:(3 * j + 2) * n, :]),
        c2[(3 * j + 2) * n:(3 * j + 3) * n, :]) for j in range(2)]
    wcat = jnp.concatenate(wcols, axis=1)                    # (BT*8, 64), lane = j*32+c
    wcat1 = jnp.concatenate([wcat[1:], jnp.zeros((1, 64), f32)], axis=0)
    wcat2 = jnp.concatenate([wcat[2:], jnp.zeros((2, 64), f32)], axis=0)
    hmax = jnp.maximum(jnp.maximum(wcat, wcat1), wcat2).reshape(BT, 8, 64)
    fc_in = jnp.concatenate([hmax[:, 0:1, :], hmax[:, 3:4, :]],
                            axis=2).reshape(BT, 128)         # lane = i*64 + j*32 + c

    # ---- FC head: Linear(128,32) + ReLU + Linear(32,1) + Sigmoid -------------
    hidden = jnp.maximum(
        jnp.dot(fc_in.astype(bf16), wfc1, preferred_element_type=f32) + bfc1, 0.0)
    logit = jnp.sum(hidden * wfc2, axis=1, keepdims=True) + bfc2        # (BT, 1)
    prob = jax.nn.sigmoid(logit)

    if BT < BT_PAD:
        prob = jnp.concatenate([prob, jnp.zeros((BT_PAD - BT, 1), f32)], axis=0)
    out_ref[0] = jnp.broadcast_to(prob, (BT_PAD, 128))       # lane-dense writeback


def init_params(key):
    ks = jax.random.split(key, 12)

    def rnd(k, shape, scale=0.1):
        return scale * jax.random.normal(k, shape, dtype=jnp.float32)

    emb = rnd(ks[0], (VOCAB, EMB_DIM))
    emb = emb.at[0].set(0.0)                       # nn.Embedding padding_idx=0
    return {
        "emb": emb,
        "q_conv1_w": rnd(ks[1], (32, 1, 3, EMB_DIM)),
        "q_conv1_b": rnd(ks[2], (32,)),
        "d_conv1_w": rnd(ks[3], (32, 1, 3, EMB_DIM)),
        "d_conv1_b": rnd(ks[4], (32,)),
        "conv2d1_w": rnd(ks[5], (32, 1, 3, 3)),
        "conv2d1_b": rnd(ks[6], (32,)),
        "conv2d2_w": rnd(ks[7], (32, 32, 3, 3)),
        "conv2d2_b": rnd(ks[8], (32,)),
        "fc1_w": rnd(ks[9], (32, 32 * 4)),
        "fc1_b": rnd(ks[10], (32,)),
        "fc2_w": rnd(ks[11], (1, 32)),
        "fc2_b": jnp.zeros((1,), jnp.float32),
    }


def pack_kernel_params(p):
    E = EMB_DIM
    assert E == 32

    def to_np(x):
        return np.asarray(x, dtype=np.float32)

    # conv1 weights, fused 3-tap im2col layout; bias folded in as row 96
    wq = np.concatenate([to_np(p["q_conv1_w"])[:, 0].reshape(32, 3 * E).T,
                         to_np(p["q_conv1_b"]).reshape(1, 32)], axis=0)    # (97, 32)
    wd = np.concatenate([to_np(p["d_conv1_w"])[:, 0].reshape(32, 3 * E).T,
                         to_np(p["d_conv1_b"]).reshape(1, 32)], axis=0)    # (97, 32)

    # first conv2d as a banded matmul weight with tile-aligned tap blocks
    w1 = to_np(p["conv2d1_w"])[:, 0]                 # (32 c, 3 kh, 3 kw)
    b1 = to_np(p["conv2d1_b"])
    wide = np.zeros((WIDE_ROWS, WIDE_LANES), np.float32)
    for kh in range(3):
        for kw in range(3):
            for wo in range(30):
                g, tap = divmod(wo, 3)
                lane = tap * TAP_STRIDE + g * 32
                wide[kh * 32 + wo + kw, lane:lane + 32] += w1[:, kh, kw]
    for tap in range(3):
        for g in range(10):
            lane = tap * TAP_STRIDE + g * 32
            wide[96, lane:lane + 32] = b1

    # second conv2d (im2col (kh,kw,ci) x co), permuted FC1, stride-3 selector
    w2 = to_np(p["conv2d2_w"]).transpose(2, 3, 1, 0).reshape(288, 32)
    wfc1 = to_np(p["fc1_w"]).reshape(32, 32, 2, 2).transpose(2, 3, 1, 0).reshape(128, 32)
    sel = np.zeros((16, 32), np.float32)
    sel[np.arange(10), 3 * np.arange(10)] = 1.0

    main = np.zeros((MAIN_ROWS, 128), np.float32)
    main[W2_R:W2_R + 288, W2_L:W2_L + 32] = w2
    main[WQ_R:WQ_R + 97, WQ_L:WQ_L + 32] = wq
    main[WD_R:WD_R + 97, WD_L:WD_L + 32] = wd
    main[FC1_R:FC1_R + 128, FC1_L:FC1_L + 32] = wfc1
    main[SEL_R:SEL_R + 16, 32:64] = sel
    main[B2_R, 32:64] = to_np(p["conv2d2_b"])
    main[BFC1_R, 32:64] = to_np(p["fc1_b"])
    main[WFC2_R, 32:64] = to_np(p["fc2_w"]).reshape(32)
    main[BFC2_R, 32] = float(to_np(p["fc2_b"])[0])

    return {"wide": jnp.asarray(wide, jnp.bfloat16),
            "main": jnp.asarray(main, jnp.bfloat16)}


def arcii_forward(params, kparams, content_ids, cit_ids):
    B, L = content_ids.shape
    E = params["emb"].shape[1]
    T = L - 2
    assert E == EMB_DIM and 1 <= T <= 8

    # >= 2 grid steps whenever B >= 2 (both v7x TensorCores); BT capped at 8.
    BT = 1 if B < 2 else min(8, B // 2)
    nb = -(-B // BT)
    B_pad = nb * BT

    def build_cols(ids):
        if B_pad > B:
            ids = jnp.pad(ids, ((0, B_pad - B), (0, 0)))   # id 0 -> zero embedding
        emb = params["emb"][ids]                            # (B_pad, L, E) f32
        cols = jnp.concatenate([emb[:, k:k + T, :] for k in range(3)], axis=2)
        cols = jnp.concatenate([cols, jnp.ones((B_pad, T, 1), jnp.float32)], axis=2)
        cols = jnp.concatenate(
            [cols, jnp.zeros((B_pad, 8 - T, COLS), jnp.float32)], axis=1)
        return cols.reshape(B_pad * 8, COLS)                # (B_pad*8, 97)

    cols_q = build_cols(content_ids)
    cols_d = build_cols(cit_ids)

    out = pl.pallas_call(
        arcii_kernel,
        grid=(nb,),
        in_specs=[
            pl.BlockSpec((BT * 8, COLS), lambda i: (i, 0)),
            pl.BlockSpec((BT * 8, COLS), lambda i: (i, 0)),
            pl.BlockSpec(kparams["wide"].shape, lambda i: (0, 0)),
            pl.BlockSpec(kparams["main"].shape, lambda i: (0, 0)),
        ],
        out_specs=pl.BlockSpec((1, 8, 128), lambda i: (i, 0, 0)),
        out_shape=jax.ShapeDtypeStruct((nb, 8, 128), jnp.float32),
        compiler_params=pltpu.CompilerParams(
            dimension_semantics=("parallel",),
            vmem_limit_bytes=32 * 1024 * 1024),
    )(cols_q, cols_d, kparams["wide"], kparams["main"])

    return out[:, :BT, 0].reshape(nb * BT, 1)[:B]            # (B, 1)


def arcii_reference(params, content_ids, cit_ids):
    """Pure-JAX mirror of the PyTorch forward (inference path)."""
    emb_q = params["emb"][content_ids]          # (B, L, E)
    emb_d = params["emb"][cit_ids]

    def conv1(x, w, bias):                      # -> (B, 32, T)
        B, L, E = x.shape
        T = L - 2
        w2d = w[:, 0].reshape(32, 3 * E)
        cols = jnp.stack([x[:, k:k + T, :] for k in range(3)], axis=2).reshape(B, T, 3 * E)
        return jnp.einsum('btk,ck->bct', cols, w2d) + bias[None, :, None]

    cq = conv1(emb_q, params["q_conv1_w"], params["q_conv1_b"])
    cd = conv1(emb_d, params["d_conv1_w"], params["d_conv1_b"])
    match = jnp.einsum('bit,bjt->bij', cq, cd)                       # (B, 32, 32)

    dn = ("NCHW", "OIHW", "NCHW")
    c1 = jax.lax.conv_general_dilated(match[:, None], params["conv2d1_w"],
                                      (1, 1), "VALID", dimension_numbers=dn)
    c1 = jax.nn.relu(c1 + params["conv2d1_b"][None, :, None, None])
    p1 = jax.lax.reduce_window(c1, -jnp.inf, jax.lax.max,
                               (1, 1, 3, 3), (1, 1, 3, 3), "VALID")
    c2 = jax.lax.conv_general_dilated(p1, params["conv2d2_w"],
                                      (1, 1), "VALID", dimension_numbers=dn)
    c2 = jax.nn.relu(c2 + params["conv2d2_b"][None, :, None, None])
    p2 = jax.lax.reduce_window(c2, -jnp.inf, jax.lax.max,
                               (1, 1, 3, 3), (1, 1, 3, 3), "VALID")
    flat = p2.reshape(p2.shape[0], -1)                               # (B, 128)
    h = jax.nn.relu(flat @ params["fc1_w"].T + params["fc1_b"])
    return jax.nn.sigmoid(h @ params["fc2_w"].T + params["fc2_b"])   # (B, 1)


if __name__ == "__main__":
    key = jax.random.PRNGKey(0)
    pkey, ckey, dkey = jax.random.split(key, 3)
    params = init_params(pkey)
    kparams = pack_kernel_params(params)

    content = jax.random.randint(ckey, (BATCH, SEQ_LEN), 0, VOCAB, dtype=jnp.int32)
    cit_content = jax.random.randint(dkey, (BATCH, SEQ_LEN), 0, VOCAB, dtype=jnp.int32)

    result = jax.block_until_ready(arcii_forward(params, kparams, content, cit_content))
    assert result.shape == (BATCH, 1)
    assert bool(jnp.all(jnp.isfinite(result)))
    assert bool(jnp.all((result >= 0.0) & (result <= 1.0)))

    ref = jax.block_until_ready(arcii_reference(params, content, cit_content))
    # bf16 weight slabs / bf16 MXU inputs vs f32 reference -> relaxed tolerance.
    assert jnp.allclose(result, ref, atol=2e-2, rtol=2e-2), (
        "kernel/reference mismatch: max abs diff = "
        f"{float(jnp.max(jnp.abs(result - ref)))}")
    print("KERNEL_OK")
</pallas_src>

<mosaic_0001>
module attributes {stable_mosaic.version = 11 : i64} {
  func.func @arcii_kernel(%arg0: i32, %arg1: memref<8x97xf32, #tpu.memory_space<vmem>>, %arg2: memref<8x97xf32, #tpu.memory_space<vmem>>, %arg3: memref<112x1152xbf16, #tpu.memory_space<vmem>>, %arg4: memref<288x128xbf16, #tpu.memory_space<vmem>>, %arg5: memref<1x8x128xf32, #tpu.memory_space<vmem>>) attributes {dimension_semantics = [#tpu.dimension_semantics<parallel>], iteration_bounds = array<i64: 2>, scalar_prefetch = 0 : i64, scratch_operands = 0 : i64, tpu.core_type = #tpu.core_type<tc>, window_params = [{transform_indices = @transform_0, window_bounds = array<i64: 8, 97>}, {transform_indices = @transform_1, window_bounds = array<i64: 8, 97>}, {pipeline_mode = #tpu.pipeline_mode<synchronous>, transform_indices = @transform_2, window_bounds = array<i64: 112, 1152>}, {pipeline_mode = #tpu.pipeline_mode<synchronous>, transform_indices = @transform_3, window_bounds = array<i64: 288, 128>}, {transform_indices = @transform_4, window_bounds = array<i64: 1, 8, 128>}]} {
    %c0 = arith.constant 0 : index
    %c32 = arith.constant 32 : index
    %0 = vector.load %arg4[%c0, %c32] : memref<288x128xbf16, #tpu.memory_space<vmem>>, vector<97x32xbf16>
    %c0_0 = arith.constant 0 : index
    %c64 = arith.constant 64 : index
    %1 = vector.load %arg4[%c0_0, %c64] : memref<288x128xbf16, #tpu.memory_space<vmem>>, vector<97x32xbf16>
    %c0_1 = arith.constant 0 : index
    %c0_2 = arith.constant 0 : index
    %2 = vector.load %arg4[%c0_1, %c0_2] : memref<288x128xbf16, #tpu.memory_space<vmem>>, vector<288x32xbf16>
    %c0_3 = arith.constant 0 : index
    %c96 = arith.constant 96 : index
    %3 = vector.load %arg4[%c0_3, %c96] : memref<288x128xbf16, #tpu.memory_space<vmem>>, vector<128x32xbf16>
    %c160 = arith.constant 160 : index
    %c32_4 = arith.constant 32 : index
    %4 = vector.load %arg4[%c160, %c32_4] : memref<288x128xbf16, #tpu.memory_space<vmem>>, vector<16x32xbf16>
    %c192 = arith.constant 192 : index
    %c32_5 = arith.constant 32 : index
    %5 = vector.load %arg4[%c192, %c32_5] : memref<288x128xbf16, #tpu.memory_space<vmem>>, vector<1x32xbf16>
    %6 = arith.extf %5 : vector<1x32xbf16> to vector<1x32xf32>
    %c208 = arith.constant 208 : index
    %c32_6 = arith.constant 32 : index
    %7 = vector.load %arg4[%c208, %c32_6] : memref<288x128xbf16, #tpu.memory_space<vmem>>, vector<1x32xbf16>
    %8 = arith.extf %7 : vector<1x32xbf16> to vector<1x32xf32>
    %c224 = arith.constant 224 : index
    %c32_7 = arith.constant 32 : index
    %9 = vector.load %arg4[%c224, %c32_7] : memref<288x128xbf16, #tpu.memory_space<vmem>>, vector<1x32xbf16>
    %10 = arith.extf %9 : vector<1x32xbf16> to vector<1x32xf32>
    %c240 = arith.constant 240 : index
    %c32_8 = arith.constant 32 : index
    %11 = vector.load %arg4[%c240, %c32_8] : memref<288x128xbf16, #tpu.memory_space<vmem>>, vector<1x1xbf16>
    %12 = arith.extf %11 : vector<1x1xbf16> to vector<1x1xf32>
    %c0_9 = arith.constant 0 : index
    %c0_10 = arith.constant 0 : index
    %13 = vector.load %arg3[%c0_9, %c0_10] : memref<112x1152xbf16, #tpu.memory_space<vmem>>, vector<96x1152xbf16>
    %c96_11 = arith.constant 96 : index
    %c0_12 = arith.constant 0 : index
    %14 = vector.load %arg3[%c96_11, %c0_12] : memref<112x1152xbf16, #tpu.memory_space<vmem>>, vector<1x1152xbf16>
    %15 = arith.extf %14 : vector<1x1152xbf16> to vector<1x1152xf32>
    %c0_13 = arith.constant 0 : index
    %c0_14 = arith.constant 0 : index
    %16 = vector.load %arg1[%c0_13, %c0_14] : memref<8x97xf32, #tpu.memory_space<vmem>>, vector<8x97xf32>
    %17 = arith.truncf %16 : vector<8x97xf32> to vector<8x97xbf16>
    %cst = arith.constant dense<0.000000e+00> : vector<8x32xf32>
    %18 = tpu.matmul %17, %0, %cst {dimension_numbers = #tpu.dot_dimension_numbers<[1], [0], [0], [1], [0, 0, 1, 1], [], []>} : vector<8x97xbf16>, vector<97x32xbf16>, vector<8x32xf32> -> vector<8x32xf32>
    %c0_15 = arith.constant 0 : index
    %c0_16 = arith.constant 0 : index
    %19 = vector.load %arg2[%c0_15, %c0_16] : memref<8x97xf32, #tpu.memory_space<vmem>>, vector<8x97xf32>
    %20 = arith.truncf %19 : vector<8x97xf32> to vector<8x97xbf16>
    %cst_17 = arith.constant dense<0.000000e+00> : vector<8x32xf32>
    %21 = tpu.matmul %20, %1, %cst_17 {dimension_numbers = #tpu.dot_dimension_numbers<[1], [0], [0], [1], [0, 0, 1, 1], [], []>} : vector<8x97xbf16>, vector<97x32xbf16>, vector<8x32xf32> -> vector<8x32xf32>
    %22 = vector.shape_cast %18 : vector<8x32xf32> to vector<1x8x32xf32>
    %23 = tpu.transpose %22, [0, 2, 1] : vector<1x8x32xf32> -> vector<1x32x8xf32>
    %24 = arith.truncf %23 : vector<1x32x8xf32> to vector<1x32x8xbf16>
    %25 = vector.shape_cast %21 : vector<8x32xf32> to vector<1x8x32xf32>
    %26 = arith.truncf %25 : vector<1x8x32xf32> to vector<1x8x32xbf16>
    "tpu.trace_start"() <{level = 10 : i32, message = "bit,btj->bij"}> : () -> ()
    %cst_18 = arith.constant dense<0.000000e+00> : vector<1x32x32xf32>
    %27 = tpu.matmul %24, %26, %cst_18 {dimension_numbers = #tpu.dot_dimension_numbers<[2], [1], [1], [2], [0, 0, 0, 1, 1, 2], [0], [0]>} : vector<1x32x8xbf16>, vector<1x8x32xbf16>, vector<1x32x32xf32> -> vector<1x32x32xf32>
    "tpu.trace_stop"() : () -> ()
    %28 = vector.extract_strided_slice %27 {offsets = [0, 1, 0], sizes = [1, 31, 32], strides = [1, 1, 1]} : vector<1x32x32xf32> to vector<1x31x32xf32>
    %cst_19 = arith.constant 0.000000e+00 : f32
    %29 = vector.broadcast %cst_19 : f32 to vector<1x1x32xf32>
    %30 = tpu.concatenate %28, %29 in 1 : vector<1x31x32xf32>, vector<1x1x32xf32> -> vector<1x32x32xf32>
    %31 = vector.extract_strided_slice %27 {offsets = [0, 2, 0], sizes = [1, 30, 32], strides = [1, 1, 1]} : vector<1x32x32xf32> to vector<1x30x32xf32>
    %cst_20 = arith.constant 0.000000e+00 : f32
    %32 = vector.broadcast %cst_20 : f32 to vector<1x2x32xf32>
    %33 = tpu.concatenate %31, %32 in 1 : vector<1x30x32xf32>, vector<1x2x32xf32> -> vector<1x32x32xf32>
    %34 = tpu.concatenate %27, %30, %33 in 2 : vector<1x32x32xf32>, vector<1x32x32xf32>, vector<1x32x32xf32> -> vector<1x32x96xf32>
    %35 = vector.shape_cast %34 : vector<1x32x96xf32> to vector<32x96xf32>
    %36 = arith.truncf %35 : vector<32x96xf32> to vector<32x96xbf16>
    %cst_21 = arith.constant dense<0.000000e+00> : vector<32x1152xf32>
    %37 = tpu.matmul %36, %13, %cst_21 {dimension_numbers = #tpu.dot_dimension_numbers<[1], [0], [0], [1], [0, 0, 1, 1], [], []>} : vector<32x96xbf16>, vector<96x1152xbf16>, vector<32x1152xf32> -> vector<32x1152xf32>
    %38 = vector.broadcast %15 : vector<1x1152xf32> to vector<32x1152xf32>
    %39 = arith.addf %37, %38 : vector<32x1152xf32>
    %cst_22 = arith.constant 0.000000e+00 : f32
    %40 = vector.broadcast %cst_22 : f32 to vector<32x1152xf32>
    %41 = arith.maximumf %39, %40 : vector<32x1152xf32>
    %42 = vector.extract_strided_slice %41 {offsets = [0, 0], sizes = [32, 320], strides = [1, 1]} : vector<32x1152xf32> to vector<32x320xf32>
    %43 = vector.extract_strided_slice %41 {offsets = [0, 384], sizes = [32, 320], strides = [1, 1]} : vector<32x1152xf32> to vector<32x320xf32>
    %44 = arith.maximumf %42, %43 : vector<32x320xf32>
    %45 = vector.extract_strided_slice %41 {offsets = [0, 768], sizes = [32, 320], strides = [1, 1]} : vector<32x1152xf32> to vector<32x320xf32>
    %46 = arith.maximumf %44, %45 : vector<32x320xf32>
    %47 = vector.extract_strided_slice %46 {offsets = [1, 0], sizes = [31, 320], strides = [1, 1]} : vector<32x320xf32> to vector<31x320xf32>
    %cst_23 = arith.constant 0.000000e+00 : f32
    %48 = vector.broadcast %cst_23 : f32 to vector<1x320xf32>
    %49 = tpu.concatenate %47, %48 in 0 : vector<31x320xf32>, vector<1x320xf32> -> vector<32x320xf32>
    %50 = vector.extract_strided_slice %46 {offsets = [2, 0], sizes = [30, 320], strides = [1, 1]} : vector<32x320xf32> to vector<30x320xf32>
    %cst_24 = arith.constant 0.000000e+00 : f32
    %51 = vector.broadcast %cst_24 : f32 to vector<2x320xf32>
    %52 = tpu.concatenate %50, %51 in 0 : vector<30x320xf32>, vector<2x320xf32> -> vector<32x320xf32>
    %53 = arith.maximumf %46, %49 : vector<32x320xf32>
    %54 = arith.maximumf %53, %52 : vector<32x320xf32>
    %55 = vector.shape_cast %54 : vector<32x320xf32> to vector<1x32x320xf32>
    %56 = arith.truncf %55 : vector<1x32x320xf32> to vector<1x32x320xbf16>
    %57 = vector.shape_cast %4 : vector<16x32xbf16> to vector<1x16x32xbf16>
    "tpu.trace_start"() <{level = 10 : i32, message = "bjr,brn->bjn"}> : () -> ()
    %cst_25 = arith.constant dense<0.000000e+00> : vector<1x16x320xf32>
    %58 = tpu.matmul %57, %56, %cst_25 {dimension_numbers = #tpu.dot_dimension_numbers<[2], [1], [1], [2], [0, 0, 0, 1, 1, 2], [0], [0]>} : vector<1x16x32xbf16>, vector<1x32x320xbf16>, vector<1x16x320xf32> -> vector<1x16x320xf32>
    "tpu.trace_stop"() : () -> ()
    %59 = arith.truncf %58 : vector<1x16x320xf32> to vector<1x16x320xbf16>
    %60 = vector.extract_strided_slice %59 {offsets = [0, 0, 0], sizes = [1, 8, 320], strides = [1, 1, 1]} : vector<1x16x320xbf16> to vector<1x8x320xbf16>
    %61 = vector.extract_strided_slice %59 {offsets = [0, 1, 0], sizes = [1, 8, 320], strides = [1, 1, 1]} : vector<1x16x320xbf16> to vector<1x8x320xbf16>
    %62 = vector.extract_strided_slice %59 {offsets = [0, 2, 0], sizes = [1, 8, 320], strides = [1, 1, 1]} : vector<1x16x320xbf16> to vector<1x8x320xbf16>
    %63 = vector.extract_strided_slice %60 {offsets = [0, 0, 0], sizes = [1, 8, 96], strides = [1, 1, 1]} : vector<1x8x320xbf16> to vector<1x8x96xbf16>
    %64 = vector.extract_strided_slice %61 {offsets = [0, 0, 0], sizes = [1, 8, 96], strides = [1, 1, 1]} : vector<1x8x320xbf16> to vector<1x8x96xbf16>
    %65 = vector.extract_strided_slice %62 {offsets = [0, 0, 0], sizes = [1, 8, 96], strides = [1, 1, 1]} : vector<1x8x320xbf16> to vector<1x8x96xbf16>
    %66 = tpu.concatenate %63, %64, %65 in 2 : vector<1x8x96xbf16>, vector<1x8x96xbf16>, vector<1x8x96xbf16> -> vector<1x8x288xbf16>
    %67 = vector.shape_cast %66 : vector<1x8x288xbf16> to vector<8x288xbf16>
    %68 = vector.extract_strided_slice %60 {offsets = [0, 0, 32], sizes = [1, 8, 96], strides = [1, 1, 1]} : vector<1x8x320xbf16> to vector<1x8x96xbf16>
    %69 = vector.extract_strided_slice %61 {offsets = [0, 0, 32], sizes = [1, 8, 96], strides = [1, 1, 1]} : vector<1x8x320xbf16> to vector<1x8x96xbf16>
    %70 = vector.extract_strided_slice %62 {offsets = [0, 0, 32], sizes = [1, 8, 96], strides = [1, 1, 1]} : vector<1x8x320xbf16> to vector<1x8x96xbf16>
    %71 = tpu.concatenate %68, %69, %70 in 2 : vector<1x8x96xbf16>, vector<1x8x96xbf16>, vector<1x8x96xbf16> -> vector<1x8x288xbf16>
    %72 = vector.shape_cast %71 : vector<1x8x288xbf16> to vector<8x288xbf16>
    %73 = vector.extract_strided_slice %60 {offsets = [0, 0, 64], sizes = [1, 8, 96], strides = [1, 1, 1]} : vector<1x8x320xbf16> to vector<1x8x96xbf16>
    %74 = vector.extract_strided_slice %61 {offsets = [0, 0, 64], sizes = [1, 8, 96], strides = [1, 1, 1]} : vector<1x8x320xbf16> to vector<1x8x96xbf16>
    %75 = vector.extract_strided_slice %62 {offsets = [0, 0, 64], sizes = [1, 8, 96], strides = [1, 1, 1]} : vector<1x8x320xbf16> to vector<1x8x96xbf16>
    %76 = tpu.concatenate %73, %74, %75 in 2 : vector<1x8x96xbf16>, vector<1x8x96xbf16>, vector<1x8x96xbf16> -> vector<1x8x288xbf16>
    %77 = vector.shape_cast %76 : vector<1x8x288xbf16> to vector<8x288xbf16>
    %78 = vector.extract_strided_slice %60 {offsets = [0, 0, 96], sizes = [1, 8, 96], strides = [1, 1, 1]} : vector<1x8x320xbf16> to vector<1x8x96xbf16>
    %79 = vector.extract_strided_slice %61 {offsets = [0, 0, 96], sizes = [1, 8, 96], strides = [1, 1, 1]} : vector<1x8x320xbf16> to vector<1x8x96xbf16>
    %80 = vector.extract_strided_slice %62 {offsets = [0, 0, 96], sizes = [1, 8, 96], strides = [1, 1, 1]} : vector<1x8x320xbf16> to vector<1x8x96xbf16>
    %81 = tpu.concatenate %78, %79, %80 in 2 : vector<1x8x96xbf16>, vector<1x8x96xbf16>, vector<1x8x96xbf16> -> vector<1x8x288xbf16>
    %82 = vector.shape_cast %81 : vector<1x8x288xbf16> to vector<8x288xbf16>
    %83 = vector.extract_strided_slice %60 {offsets = [0, 0, 128], sizes = [1, 8, 96], strides = [1, 1, 1]} : vector<1x8x320xbf16> to vector<1x8x96xbf16>
    %84 = vector.extract_strided_slice %61 {offsets = [0, 0, 128], sizes = [1, 8, 96], strides = [1, 1, 1]} : vector<1x8x320xbf16> to vector<1x8x96xbf16>
    %85 = vector.extract_strided_slice %62 {offsets = [0, 0, 128], sizes = [1, 8, 96], strides = [1, 1, 1]} : vector<1x8x320xbf16> to vector<1x8x96xbf16>
    %86 = tpu.concatenate %83, %84, %85 in 2 : vector<1x8x96xbf16>, vector<1x8x96xbf16>, vector<1x8x96xbf16> -> vector<1x8x288xbf16>
    %87 = vector.shape_cast %86 : vector<1x8x288xbf16> to vector<8x288xbf16>
    %88 = vector.extract_strided_slice %60 {offsets = [0, 0, 160], sizes = [1, 8, 96], strides = [1, 1, 1]} : vector<1x8x320xbf16> to vector<1x8x96xbf16>
    %89 = vector.extract_strided_slice %61 {offsets = [0, 0, 160], sizes = [1, 8, 96], strides = [1, 1, 1]} : vector<1x8x320xbf16> to vector<1x8x96xbf16>
    %90 = vector.extract_strided_slice %62 {offsets = [0, 0, 160], sizes = [1, 8, 96], strides = [1, 1, 1]} : vector<1x8x320xbf16> to vector<1x8x96xbf16>
    %91 = tpu.concatenate %88, %89, %90 in 2 : vector<1x8x96xbf16>, vector<1x8x96xbf16>, vector<1x8x96xbf16> -> vector<1x8x288xbf16>
    %92 = vector.shape_cast %91 : vector<1x8x288xbf16> to vector<8x288xbf16>
    %93 = tpu.concatenate %67, %72, %77, %82, %87, %92 in 0 : vector<8x288xbf16>, vector<8x288xbf16>, vector<8x288xbf16>, vector<8x288xbf16>, vector<8x288xbf16>, vector<8x288xbf16> -> vector<48x288xbf16>
    %cst_26 = arith.constant dense<0.000000e+00> : vector<48x32xf32>
    %94 = tpu.matmul %93, %2, %cst_26 {dimension_numbers = #tpu.dot_dimension_numbers<[1], [0], [0], [1], [0, 0, 1, 1], [], []>} : vector<48x288xbf16>, vector<288x32xbf16>, vector<48x32xf32> -> vector<48x32xf32>
    %95 = vector.broadcast %6 : vector<1x32xf32> to vector<48x32xf32>
    %96 = arith.addf %94, %95 : vector<48x32xf32>
    %cst_27 = arith.constant 0.000000e+00 : f32
    %97 = vector.broadcast %cst_27 : f32 to vector<48x32xf32>
    %98 = arith.maximumf %96, %97 : vector<48x32xf32>
    %99 = vector.extract_strided_slice %98 {offsets = [0, 0], sizes = [8, 32], strides = [1, 1]} : vector<48x32xf32> to vector<8x32xf32>
    %100 = vector.extract_strided_slice %98 {offsets = [8, 0], sizes = [8, 32], strides = [1, 1]} : vector<48x32xf32> to vector<8x32xf32>
    %101 = arith.maximumf %99, %100 : vector<8x32xf32>
    %102 = vector.extract_strided_slice %98 {offsets = [16, 0], sizes = [8, 32], strides = [1, 1]} : vector<48x32xf32> to vector<8x32xf32>
    %103 = arith.maximumf %101, %102 : vector<8x32xf32>
    %104 = vector.extract_strided_slice %98 {offsets = [24, 0], sizes = [8, 32], strides = [1, 1]} : vector<48x32xf32> to vector<8x32xf32>
    %105 = vector.extract_strided_slice %98 {offsets = [32, 0], sizes = [8, 32], strides = [1, 1]} : vector<48x32xf32> to vector<8x32xf32>
    %106 = arith.maximumf %104, %105 : vector<8x32xf32>
    %107 = vector.extract_strided_slice %98 {offsets = [40, 0], sizes = [8, 32], strides = [1, 1]} : vector<48x32xf32> to vector<8x32xf32>
    %108 = arith.maximumf %106, %107 : vector<8x32xf32>
    %109 = tpu.concatenate %103, %108 in 1 : vector<8x32xf32>, vector<8x32xf32> -> vector<8x64xf32>
    %110 = vector.extract_strided_slice %109 {offsets = [1, 0], sizes = [7, 64], strides = [1, 1]} : vector<8x64xf32> to vector<7x64xf32>
    %cst_28 = arith.constant 0.000000e+00 : f32
    %111 = vector.broadcast %cst_28 : f32 to vector<1x64xf32>
    %112 = tpu.concatenate %110, %111 in 0 : vector<7x64xf32>, vector<1x64xf32> -> vector<8x64xf32>
    %113 = vector.extract_strided_slice %109 {offsets = [2, 0], sizes = [6, 64], strides = [1, 1]} : vector<8x64xf32> to vector<6x64xf32>
    %cst_29 = arith.constant 0.000000e+00 : f32
    %114 = vector.broadcast %cst_29 : f32 to vector<2x64xf32>
    %115 = tpu.concatenate %113, %114 in 0 : vector<6x64xf32>, vector<2x64xf32> -> vector<8x64xf32>
    %116 = arith.maximumf %109, %112 : vector<8x64xf32>
    %117 = arith.maximumf %116, %115 : vector<8x64xf32>
    %118 = vector.shape_cast %117 : vector<8x64xf32> to vector<1x8x64xf32>
    %119 = vector.extract_strided_slice %118 {offsets = [0, 0, 0], sizes = [1, 1, 64], strides = [1, 1, 1]} : vector<1x8x64xf32> to vector<1x1x64xf32>
    %120 = vector.extract_strided_slice %118 {offsets = [0, 3, 0], sizes = [1, 1, 64], strides = [1, 1, 1]} : vector<1x8x64xf32> to vector<1x1x64xf32>
    %121 = tpu.concatenate %119, %120 in 2 : vector<1x1x64xf32>, vector<1x1x64xf32> -> vector<1x1x128xf32>
    %122 = vector.shape_cast %121 : vector<1x1x128xf32> to vector<1x128xf32>
    %123 = arith.truncf %122 : vector<1x128xf32> to vector<1x128xbf16>
    %cst_30 = arith.constant dense<0.000000e+00> : vector<1x32xf32>
    %124 = tpu.matmul %123, %3, %cst_30 {dimension_numbers = #tpu.dot_dimension_numbers<[1], [0], [0], [1], [0, 0, 1, 1], [], []>} : vector<1x128xbf16>, vector<128x32xbf16>, vector<1x32xf32> -> vector<1x32xf32>
    %125 = arith.addf %124, %8 : vector<1x32xf32>
    %cst_31 = arith.constant 0.000000e+00 : f32
    %126 = vector.broadcast %cst_31 : f32 to vector<1x32xf32>
    %127 = arith.maximumf %125, %126 : vector<1x32xf32>
    %128 = arith.mulf %127, %10 : vector<1x32xf32>
    %cst_32 = arith.constant dense<0.000000e+00> : vector<1xf32>
    %129 = vector.multi_reduction <add>, %128, %cst_32 [1] : vector<1x32xf32> to vector<1xf32>
    %130 = vector.shape_cast %129 : vector<1xf32> to vector<1x1xf32>
    %131 = arith.addf %130, %12 : vector<1x1xf32>
    %132 = arith.negf %131 : vector<1x1xf32>
    %133 = math.exp %132 : vector<1x1xf32>
    %cst_33 = arith.constant 1.000000e+00 : f32
    %134 = vector.broadcast %cst_33 : f32 to vector<1x1xf32>
    %135 = arith.addf %134, %133 : vector<1x1xf32>
    %136 = arith.divf %134, %135 : vector<1x1xf32>
    %cst_34 = arith.constant 0.000000e+00 : f32
    %137 = vector.broadcast %cst_34 : f32 to vector<7x1xf32>
    %138 = tpu.concatenate %136, %137 in 0 : vector<1x1xf32>, vector<7x1xf32> -> vector<8x1xf32>
    %139 = vector.shape_cast %138 : vector<8x1xf32> to vector<8x1xf32>
    %140 = vector.broadcast %139 : vector<8x1xf32> to vector<8x128xf32>
    %c0_35 = arith.constant 0 : index
    %c0_36 = arith.constant 0 : index
    %c0_37 = arith.constant 0 : index
    %141 = vector.load %arg5[%c0_35, %c0_36, %c0_37] : memref<1x8x128xf32, #tpu.memory_space<vmem>>, vector<1x8x128xf32>
    %142 = vector.shape_cast %141 : vector<1x8x128xf32> to vector<8x128xf32>
    %143 = vector.shape_cast %140 : vector<8x128xf32> to vector<1x8x128xf32>
    tpu.vector_store %arg5[%c0_35, %c0_36, %c0_37], %143 {strides = array<i32>} : memref<1x8x128xf32, #tpu.memory_space<vmem>>, vector<1x8x128xf32>,
    return
  }
  func.func @transform_0(%arg0: i32) -> (i32, i32) {
    %c0_i32 = arith.constant 0 : i32
    %c0_i32_0 = arith.constant 0 : i32
    return %arg0, %c0_i32 : i32, i32
  }
  func.func @transform_1(%arg0: i32) -> (i32, i32) {
    %c0_i32 = arith.constant 0 : i32
    %c0_i32_0 = arith.constant 0 : i32
    return %arg0, %c0_i32 : i32, i32
  }
  func.func @transform_2(%arg0: i32) -> (i32, i32) {
    %c0_i32 = arith.constant 0 : i32
    %c0_i32_0 = arith.constant 0 : i32
    %c0_i32_1 = arith.constant 0 : i32
    return %c0_i32, %c0_i32_0 : i32, i32
  }
  func.func @transform_3(%arg0: i32) -> (i32, i32) {
    %c0_i32 = arith.constant 0 : i32
    %c0_i32_0 = arith.constant 0 : i32
    %c0_i32_1 = arith.constant 0 : i32
    return %c0_i32, %c0_i32_0 : i32, i32
  }
  func.func @transform_4(%arg0: i32) -> (i32, i32, i32) {
    %c0_i32 = arith.constant 0 : i32
    %c0_i32_0 = arith.constant 0 : i32
    %c0_i32_1 = arith.constant 0 : i32
    return %arg0, %c0_i32, %c0_i32_0 : i32, i32, i32
  }
}

</mosaic_0001>

<llo_original>
// kernel: tpu_custom_call.1
$region0: #{tpu_custom_call.1}
  #allocation0 [shape = 'u32[]', space=smem, size = 0x4, offset = 0x4, fixed_abs, tag = 'smem constant byte address 0x4 - core index']
  #allocation1 [shape = 'u32[144,128]{1,0:T(1,128)}', space=vmem, size = 0x12000, scoped, tag = 'internal scratch']
  %s0 = inlined_call_operand.hbm [shape: f32[16,97], index: 0, kind: input, shape index: {}]
  %s1 = inlined_call_operand.hbm [shape: f32[16,97], index: 1, kind: input, shape index: {}]
  %s2 = inlined_call_operand.hbm [shape: bf16[112,1152], index: 2, kind: input, shape index: {}]
  %s3 = inlined_call_operand.hbm [shape: bf16[288,128], index: 3, kind: input, shape index: {}]
  %s4 = inlined_call_operand.hbm [shape: f32[2,8,128], index: 4, kind: output, shape index: {}]
  %s5 = sld [smem:[#allocation0]]
  $region65: #{tpu_custom_call.1} parent=0
    _
  %s7 = ssub.s32 1, %s5
  %s8 = scalar_select 0, %s7, %s5
  $region1: #{tpu_custom_call.1} parent=0
    #allocation2 [shape = 'u8[8192]{0}', space=vmem, size = 0x2000, scoped, tag = 'input window, operand 0']
    #allocation3 [shape = 's32[2]{0}', space=sflag, size = 0x8, scoped, tag = 'scoped memory for tpu_custom_call.1']
    #allocation4 [shape = 's32[2]{0}', space=sflag, size = 0x8, scoped, tag = 'scoped memory for tpu_custom_call.1']
    #allocation5 [shape = 'u8[8192]{0}', space=vmem, size = 0x2000, scoped, tag = 'input window, operand 1']
    #allocation6 [shape = 's32[2]{0}', space=sflag, size = 0x8, scoped, tag = 'scoped memory for tpu_custom_call.1']
    #allocation7 [shape = 'u8[258048]{0}', space=vmem, size = 0x3f000, scoped, tag = 'input window, operand 2, single buffered']
    #allocation8 [shape = 'u8[73728]{0}', space=vmem, size = 0x12000, scoped, tag = 'input window, operand 3, single buffered']
    #allocation9 [shape = 's32[1]{0}', space=sflag, size = 0x4, scoped, tag = 'scoped memory for tpu_custom_call.1']
    #allocation10 [shape = 'u8[8192]{0}', space=vmem, size = 0x2000, scoped, tag = 'output window, operand 0']
    %9 = vsyncpa [#allocation3], 0
    %s10 = scalar_lea.sflag [#allocation3], 1
    %11 = vsyncpa %s10, 0
    %12 = vsyncpa [#allocation6], 0
    %s13 = scalar_lea.sflag [#allocation6], 1
    %14 = vsyncpa %s13, 0
    %15 = vsyncpa [#allocation9], 0
    %16 = vsyncpa [#allocation4], 0
    %s17 = scalar_lea.sflag [#allocation4], 1
    %18 = vsyncpa %s17, 0
    loop: start=0, step=1, limit=4
    $region2: #{tpu_custom_call.1} parent=1 // loop_pre_header
      _
    $region3: #{tpu_custom_call.1} parent=1 // loop_header
      %s20 = sphi 0, %s24
      %p21 = scmp.ge.s32.totalorder %s20, 4
      %s30 = sphi 0, %s32
      %s33 = sphi 0, %s30
      %s34 = sphi 0, %s33
      %s50 = sphi 0, %s34
      %s56 = sphi 0, %s58
      %s59 = sphi 0, %s56
      %s60 = sphi 0, %s59
      %s76 = sphi 0, %s60
      %s80 = sphi 0, %s80
      %s82 = sphi 0, %s80
      %s83 = sphi 0, %s82
      %s97 = sphi 0, %s83
      %s101 = sphi 0, %s101
      %s103 = sphi 0, %s101
      %s104 = sphi 0, %s103
      %s118 = sphi 0, %s104
      %s124 = sphi 0, %s126
      %s127 = sphi 0, %s124
      %s128 = sphi 0, %s127
      %s144 = sphi 0, %s128
    $region4: #{tpu_custom_call.1} parent=1 // loop_header_branch
      %23 = sbr.rel (%p21) target = $region8
    $region5: #{tpu_custom_call.1} parent=1 // loop_body
      %s25 = ssub.s32 %s20, 1
      %s26 = ssub.s32 %s20, 2
      %s27 = sadd.s32 %s20, 1
      %s28 = ssub.s32 %s20, %s27
      %p29 = scmp.eq.s32.totalorder %s28, 0
      %s31 = sadd.s32 %s30, 1
      %s32 = scalar_select %p29, %s30, %s31
      %p35 = pneg %p29
      %p36 = scmp.eq.s32.totalorder %s20, 1
      %p37 = por %p35, %p36
      %p38 = scmp.ne.s32.totalorder %s30, %s33
      %p39 = scmp.eq.s32.totalorder %s20, 0
      %p40 = por %p38, %p39
      %p41 = scmp.ne.s32.totalorder %s30, %s33
      %p42 = scmp.eq.s32.totalorder %s25, 1
      %p43 = por %p41, %p42
      %p44 = scmp.ne.s32.totalorder %s33, %s34
      %p45 = scmp.eq.s32.totalorder %s25, 0
      %p46 = por %p44, %p45
      %p47 = scmp.ne.s32.totalorder %s33, %s34
      %p48 = scmp.eq.s32.totalorder %s26, 1
      %p49 = por %p47, %p48
      %p51 = scmp.ne.s32.totalorder %s34, %s50
      %p52 = scmp.eq.s32.totalorder %s26, 0
      %p53 = por %p51, %p52
      %s54 = ssub.s32 %s20, %s27
      %p55 = scmp.eq.s32.totalorder %s54, 0
      %s57 = sadd.s32 %s56, 1
      %s58 = scalar_select %p55, %s56, %s57
      %p61 = pneg %p55
      %p62 = scmp.eq.s32.totalorder %s20, 1
      %p63 = por %p61, %p62
      %p64 = scmp.ne.s32.totalorder %s56, %s59
      %p65 = scmp.eq.s32.totalorder %s20, 0
      %p66 = por %p64, %p65
      %p67 = scmp.ne.s32.totalorder %s56, %s59
      %p68 = scmp.eq.s32.totalorder %s25, 1
      %p69 = por %p67, %p68
      %p70 = scmp.ne.s32.totalorder %s59, %s60
      %p71 = scmp.eq.s32.totalorder %s25, 0
      %p72 = por %p70, %p71
      %p73 = scmp.ne.s32.totalorder %s59, %s60
      %p74 = scmp.eq.s32.totalorder %s26, 1
      %p75 = por %p73, %p74
      %p77 = scmp.ne.s32.totalorder %s60, %s76
      %p78 = scmp.eq.s32.totalorder %s26, 0
      %p79 = por %p77, %p78
      %s81 = sadd.s32 %s80, 1
      %p84 = scmp.eq.s32.totalorder %s20, 1
      %p85 = scmp.ne.s32.totalorder %s80, %s82
      %p86 = scmp.eq.s32.totalorder %s20, 0
      %p87 = por %p85, %p86
      %p88 = scmp.ne.s32.totalorder %s80, %s82
      %p89 = scmp.eq.s32.totalorder %s25, 1
      %p90 = por %p88, %p89
      %p91 = scmp.ne.s32.totalorder %s82, %s83
      %p92 = scmp.eq.s32.totalorder %s25, 0
      %p93 = por %p91, %p92
      %p94 = scmp.ne.s32.totalorder %s82, %s83
      %p95 = scmp.eq.s32.totalorder %s26, 1
      %p96 = por %p94, %p95
      %p98 = scmp.ne.s32.totalorder %s83, %s97
      %p99 = scmp.eq.s32.totalorder %s26, 0
      %p100 = por %p98, %p99
      %s102 = sadd.s32 %s101, 1
      %p105 = scmp.eq.s32.totalorder %s20, 1
      %p106 = scmp.ne.s32.totalorder %s101, %s103
      %p107 = scmp.eq.s32.totalorder %s20, 0
      %p108 = por %p106, %p107
      %p109 = scmp.ne.s32.totalorder %s101, %s103
      %p110 = scmp.eq.s32.totalorder %s25, 1
      %p111 = por %p109, %p110
      %p112 = scmp.ne.s32.totalorder %s103, %s104
      %p113 = scmp.eq.s32.totalorder %s25, 0
      %p114 = por %p112, %p113
      %p115 = scmp.ne.s32.totalorder %s103, %s104
      %p116 = scmp.eq.s32.totalorder %s26, 1
      %p117 = por %p115, %p116
      %p119 = scmp.ne.s32.totalorder %s104, %s118
      %p120 = scmp.eq.s32.totalorder %s26, 0
      %p121 = por %p119, %p120
      %s122 = ssub.s32 %s20, %s27
      %p123 = scmp.eq.s32.totalorder %s122, 0
      %s125 = sadd.s32 %s124, 1
      %s126 = scalar_select %p123, %s124, %s125
      %p129 = pneg %p123
      %p130 = scmp.eq.s32.totalorder %s20, 1
      %p131 = por %p129, %p130
      %p132 = scmp.ne.s32.totalorder %s124, %s127
      %p133 = scmp.eq.s32.totalorder %s20, 0
      %p134 = por %p132, %p133
      %p135 = scmp.ne.s32.totalorder %s124, %s127
      %p136 = scmp.eq.s32.totalorder %s25, 1
      %p137 = por %p135, %p136
      %p138 = scmp.ne.s32.totalorder %s127, %s128
      %p139 = scmp.eq.s32.totalorder %s25, 0
      %p140 = por %p138, %p139
      %p141 = scmp.ne.s32.totalorder %s127, %s128
      %p142 = scmp.eq.s32.totalorder %s26, 1
      %p143 = por %p141, %p142
      %p145 = scmp.ne.s32.totalorder %s128, %s144
      %p146 = scmp.eq.s32.totalorder %s26, 0
      %p147 = por %p145, %p146
      %p148 = scmp.le.s32.totalorder 1, %s20
      %p149 = scmp.lt.s32.totalorder %s20, 3
      %p150 = pnand %p148, %p149
      %p151 = pneg %p150
      // Predicated region
      $region9: #{tpu_custom_call.1} parent=5 // pred_check
        _
      $region10: #{tpu_custom_call.1} parent=5 // pred_check_branch
        %153 = sbr.rel (%p150) target = $region12
      $region11: #{tpu_custom_call.1} parent=5 // pred_region
        %s154 = ssub.s32 %s20, 1
        // Predicated region
        $region13: #{tpu_custom_call.1} parent=11 // pred_check
          %p155 = pneg %p93
        $region14: #{tpu_custom_call.1} parent=11 // pred_check_branch
          %157 = sbr.rel (%p155) target = $region16
        $region15: #{tpu_custom_call.1} parent=11 // pred_region
          %s159 = ssub.s32 8064, 8064
          %160 = vsyncadd [#allocation6], %s159
          %s161 = sshll.u32 [#allocation7], 4
          %s162 = int_to_ptr.vmem [resolvable:$true] %s161
          %167 = dma.hbm_to_vmem [thread:$0]  %s2, 8064, %s162, [#allocation6], 576, 576, 36
        $region16: #{tpu_custom_call.1} parent=11 // pred_fallthru
          _
        // Predicated region
        $region17: #{tpu_custom_call.1} parent=11 // pred_check
          %p168 = pneg %p114
        $region18: #{tpu_custom_call.1} parent=11 // pred_check_branch
          %170 = sbr.rel (%p168) target = $region20
        $region19: #{tpu_custom_call.1} parent=11 // pred_region
          %s172 = ssub.s32 2304, 2304
          %173 = vsyncadd [#allocation9], %s172
          %s174 = sshll.u32 [#allocation8], 4
          %s175 = int_to_ptr.vmem [resolvable:$true] %s174
          %180 = dma.hbm_to_vmem [thread:$0]  %s3, 2304, %s175, [#allocation9], 64, 64, 4
        $region20: #{tpu_custom_call.1} parent=11 // pred_fallthru
          _
      $region12: #{tpu_custom_call.1} parent=5 // pred_fallthru
        _
      %p181 = scmp.lt.s32.totalorder %s20, 2
      // Predicated region
      $region21: #{tpu_custom_call.1} parent=5 // pred_check
        %p182 = pneg %p181
      $region22: #{tpu_custom_call.1} parent=5 // pred_check_branch
        %184 = sbr.rel (%p182) target = $region24
      $region23: #{tpu_custom_call.1} parent=5 // pred_region
        // Predicated region
        $region25: #{tpu_custom_call.1} parent=23 // pred_check
          %p185 = pneg %p40
        $region26: #{tpu_custom_call.1} parent=23 // pred_check_branch
          %187 = sbr.rel (%p185) target = $region28
        $region27: #{tpu_custom_call.1} parent=23 // pred_region
          %s188 = sand.u32 %s30, 1
          %s189 = scalar_lea.sflag [#allocation3], %s188
          %s190 = sand.u32 %s30, 1
          %s191 = smul.addr %s190, 8
          %s192 = scalar_lea.vmem [#allocation2], %s191
          %s194 = ssub.s32 128, 128
          %195 = vsyncadd %s189, %s194
          %s196 = smul.addr %s20, 128
          %s197 = scalar_lea.hbm %s0, %s196
          %s199 = sshll.u32 %s192, 4
          %s200 = int_to_ptr.vmem [resolvable:$true] %s199
          %202 = dma.hbm_to_vmem [thread:$0]  %s197, 128, %s200, %s189
        $region28: #{tpu_custom_call.1} parent=23 // pred_fallthru
          _
        // Predicated region
        $region29: #{tpu_custom_call.1} parent=23 // pred_check
          %p203 = pneg %p66
        $region30: #{tpu_custom_call.1} parent=23 // pred_check_branch
          %205 = sbr.rel (%p203) target = $region32
        $region31: #{tpu_custom_call.1} parent=23 // pred_region
          %s206 = sand.u32 %s20, 1
          %s207 = scalar_lea.sflag [#allocation6], %s206
          %s208 = sand.u32 %s56, 1
          %s209 = smul.addr %s208, 8
          %s210 = scalar_lea.vmem [#allocation5], %s209
          %s212 = ssub.s32 128, 128
          %213 = vsyncadd %s207, %s212
          %s214 = smul.addr %s20, 128
          %s215 = scalar_lea.hbm %s1, %s214
          %s217 = sshll.u32 %s210, 4
          %s218 = int_to_ptr.vmem [resolvable:$true] %s217
          %220 = dma.hbm_to_vmem [thread:$0]  %s215, 128, %s218, %s207
        $region32: #{tpu_custom_call.1} parent=23 // pred_fallthru
          _
      $region24: #{tpu_custom_call.1} parent=5 // pred_fallthru
        _
      %p221 = scmp.le.s32.totalorder 1, %s20
      %p222 = scmp.lt.s32.totalorder %s20, 3
      %p223 = pnand %p221, %p222
      %p224 = pneg %p223
      // Predicated region
      $region33: #{tpu_custom_call.1} parent=5 // pred_check
        _
      $region34: #{tpu_custom_call.1} parent=5 // pred_check_branch
        %226 = sbr.rel (%p223) target = $region36
      $region35: #{tpu_custom_call.1} parent=5 // pred_region
        %s227 = ssub.s32 %s20, 1
        %s228 = sand.u32 %s33, 1
        %s229 = scalar_lea.sflag [#allocation3], %s228
        %s230 = sand.u32 %s33, 1
        %s231 = smul.addr %s230, 8
        %s232 = scalar_lea.vmem [#allocation2], %s231
        // Predicated region
        $region37: #{tpu_custom_call.1} parent=35 // pred_check
          %p233 = pneg %p46
        $region38: #{tpu_custom_call.1} parent=35 // pred_check_branch
          %235 = sbr.rel (%p233) target = $region40
        $region39: #{tpu_custom_call.1} parent=35 // pred_region
          %236 = dma.done %s229, 128
        $region40: #{tpu_custom_call.1} parent=35 // pred_fallthru
          _
        %s237 = sand.u32 %s25, 1
        %s238 = scalar_lea.sflag [#allocation6], %s237
        %s239 = sand.u32 %s59, 1
        %s240 = smul.addr %s239, 8
        %s241 = scalar_lea.vmem [#allocation5], %s240
        // Predicated region
        $region41: #{tpu_custom_call.1} parent=35 // pred_check
          %p242 = pneg %p72
        $region42: #{tpu_custom_call.1} parent=35 // pred_check_branch
          %244 = sbr.rel (%p242) target = $region44
        $region43: #{tpu_custom_call.1} parent=35 // pred_region
          %245 = dma.done %s238, 128
        $region44: #{tpu_custom_call.1} parent=35 // pred_fallthru
          _
        // Predicated region
        $region45: #{tpu_custom_call.1} parent=35 // pred_check
          %p246 = pneg %p93
        $region46: #{tpu_custom_call.1} parent=35 // pred_check_branch
          %248 = sbr.rel (%p246) target = $region48
        $region47: #{tpu_custom_call.1} parent=35 // pred_region
          %249 = dma.done [#allocation6], 8064
        $region48: #{tpu_custom_call.1} parent=35 // pred_fallthru
          _
        // Predicated region
        $region49: #{tpu_custom_call.1} parent=35 // pred_check
          %p250 = pneg %p114
        $region50: #{tpu_custom_call.1} parent=35 // pred_check_branch
          %252 = sbr.rel (%p250) target = $region52
        $region51: #{tpu_custom_call.1} parent=35 // pred_region
          %253 = dma.done [#allocation9], 2304
        $region52: #{tpu_custom_call.1} parent=35 // pred_fallthru
          _
        %s254 = sand.u32 %s33, 1
        %s255 = scalar_lea.sflag [#allocation3], %s254
        %s256 = sand.u32 %s33, 1
        %s257 = smul.addr %s256, 8
        %s258 = scalar_lea.vmem [#allocation2], %s257
        %p259 = pneg %p46
        %p260 = pneg %p43
        %s261 = sand.u32 %s25, 1
        %s262 = scalar_lea.sflag [#allocation6], %s261
        %s263 = sand.u32 %s59, 1
        %s264 = smul.addr %s263, 8
        %s265 = scalar_lea.vmem [#allocation5], %s264
        %p266 = pneg %p72
        %p267 = pneg %p69
        %p268 = pneg %p93
        %p269 = pneg %p90
        %p270 = pneg %p114
        %p271 = pneg %p111
        %p272 = pneg %p140
        %p273 = pneg %p137
        %s274 = sand.u32 %s127, 1
        %s275 = scalar_lea.sflag [#allocation4], %s274
        %s276 = sand.u32 %s127, 1
        %s277 = smul.addr %s276, 8
        %s278 = scalar_lea.vmem [#allocation10], %s277
        %v280 = vld [vmem:[#allocation8] sm:$0xf]
        %v281 = vld [vmem:[#allocation8 + $0x4] sm:$0xf]
        %v282 = vld [vmem:[#allocation8 + $0x8] sm:$0xf]
        %v283 = vld [vmem:[#allocation8 + $0xc] sm:$0xf]
        %v284 = vld [vmem:[#allocation8 + $0x10] sm:$0xf]
        %v285 = vld [vmem:[#allocation8 + $0x14] sm:$0xf]
        %v286 = vld [vmem:[#allocation8 + $0x18] sm:$0xf]
        %v287 = vld [vmem:[#allocation8 + $0x1c] sm:$0xf]
        %v288 = vld [vmem:[#allocation8 + $0x20] sm:$0xf]
        %v289 = vld [vmem:[#allocation8 + $0x24] sm:$0xf]
        %v290 = vld [vmem:[#allocation8 + $0x28] sm:$0xf]
        %v291 = vld [vmem:[#allocation8 + $0x2c] sm:$0xf]
        %v292 = vld [vmem:[#allocation8 + $0x30] sm:$0x1]
        %v293 = vld [vmem:[#allocation8] sm:$0xf]
        %v294 = vld [vmem:[#allocation8 + $0x4] sm:$0xf]
        %v295 = vld [vmem:[#allocation8 + $0x8] sm:$0xf]
        %v296 = vld [vmem:[#allocation8 + $0xc] sm:$0xf]
        %v297 = vld [vmem:[#allocation8 + $0x10] sm:$0xf]
        %v298 = vld [vmem:[#allocation8 + $0x14] sm:$0xf]
        %v299 = vld [vmem:[#allocation8 + $0x18] sm:$0xf]
        %v300 = vld [vmem:[#allocation8 + $0x1c] sm:$0xf]
        %v301 = vld [vmem:[#allocation8 + $0x20] sm:$0xf]
        %v302 = vld [vmem:[#allocation8 + $0x24] sm:$0xf]
        %v303 = vld [vmem:[#allocation8 + $0x28] sm:$0xf]
        %v304 = vld [vmem:[#allocation8 + $0x2c] sm:$0xf]
        %v305 = vld [vmem:[#allocation8 + $0x30] sm:$0xf]
        %v306 = vld [vmem:[#allocation8 + $0x34] sm:$0xf]
        %v307 = vld [vmem:[#allocation8 + $0x38] sm:$0xf]
        %v308 = vld [vmem:[#allocation8 + $0x3c] sm:$0xf]
        %v309 = vld [vmem:[#allocation8 + $0x40] sm:$0xf]
        %v310 = vld [vmem:[#allocation8 + $0x44] sm:$0xf]
        %v311 = vld [vmem:[#allocation8 + $0x48] sm:$0xf]
        %v312 = vld [vmem:[#allocation8 + $0x4c] sm:$0xf]
        %v313 = vld [vmem:[#allocation8 + $0x50] sm:$0xf]
        %v314 = vld [vmem:[#allocation8 + $0x54] sm:$0xf]
        %v315 = vld [vmem:[#allocation8 + $0x58] sm:$0xf]
        %v316 = vld [vmem:[#allocation8 + $0x5c] sm:$0xf]
        %v317 = vld [vmem:[#allocation8 + $0x60] sm:$0xf]
        %v318 = vld [vmem:[#allocation8 + $0x64] sm:$0xf]
        %v319 = vld [vmem:[#allocation8 + $0x68] sm:$0xf]
        %v320 = vld [vmem:[#allocation8 + $0x6c] sm:$0xf]
        %v321 = vld [vmem:[#allocation8 + $0x70] sm:$0xf]
        %v322 = vld [vmem:[#allocation8 + $0x74] sm:$0xf]
        %v323 = vld [vmem:[#allocation8 + $0x78] sm:$0xf]
        %v324 = vld [vmem:[#allocation8 + $0x7c] sm:$0xf]
        %v325 = vld [vmem:[#allocation8 + $0x80] sm:$0xf]
        %v326 = vld [vmem:[#allocation8 + $0x84] sm:$0xf]
        %v327 = vld [vmem:[#allocation8 + $0x88] sm:$0xf]
        %v328 = vld [vmem:[#allocation8 + $0x8c] sm:$0xf]
        %v329 = vld [vmem:[#allocation8 + $0x30] sm:$0xf]
        %v330 = vld [vmem:[#allocation8 + $0x34] sm:$0xf]
        %v331 = vld [vmem:[#allocation8 + $0x38] sm:$0xf]
        %v332 = vld [vmem:[#allocation8 + $0x3c] sm:$0xf]
        %v333 = vld [vmem:[#allocation8 + $0x50] sm:$0xf]
        %v334 = vld [vmem:[#allocation8 + $0x54] sm:$0xf]
        %v335 = vld [vmem:[#allocation8 + $0x60] sm:$0x1]
        %v336 = vunpack.c.l.bf16 %v335
        %v337 = vld [vmem:[#allocation8 + $0x68] sm:$0x1]
        %v338 = vunpack.c.l.bf16 %v337
        %v339 = vld [vmem:[#allocation8 + $0x70] sm:$0x1]
        %v340 = vunpack.c.l.bf16 %v339
        %v341 = vld [vmem:[#allocation8 + $0x78] sm:$0x1]
        %v342 = vunpack.c.l.bf16 %v341
        %v343 = vld [vmem:[#allocation7] sm:$0xff]
        %v344 = vld [vmem:[#allocation7 + $0x8] sm:$0xff]
        %v345 = vld [vmem:[#allocation7 + $0x10] sm:$0xff]
        %v346 = vld [vmem:[#allocation7 + $0x18] sm:$0xff]
        %v347 = vld [vmem:[#allocation7 + $0x24] sm:$0xff]
        %v348 = vld [vmem:[#allocation7 + $0x2c] sm:$0xff]
        %v349 = vld [vmem:[#allocation7 + $0x34] sm:$0xff]
        %v350 = vld [vmem:[#allocation7 + $0x3c] sm:$0xff]
        %v351 = vld [vmem:[#allocation7 + $0x48] sm:$0xff]
        %v352 = vld [vmem:[#allocation7 + $0x50] sm:$0xff]
        %v353 = vld [vmem:[#allocation7 + $0x58] sm:$0xff]
        %v354 = vld [vmem:[#allocation7 + $0x60] sm:$0xff]
        %v355 = vld [vmem:[#allocation7 + $0x6c] sm:$0xff]
        %v356 = vld [vmem:[#allocation7 + $0x74] sm:$0xff]
        %v357 = vld [vmem:[#allocation7 + $0x7c] sm:$0xff]
        %v358 = vld [vmem:[#allocation7 + $0x84] sm:$0xff]
        %v359 = vld [vmem:[#allocation7 + $0x90] sm:$0xff]
        %v360 = vld [vmem:[#allocation7 + $0x98] sm:$0xff]
        %v361 = vld [vmem:[#allocation7 + $0xa0] sm:$0xff]
        %v362 = vld [vmem:[#allocation7 + $0xa8] sm:$0xff]
        %v363 = vld [vmem:[#allocation7 + $0xb4] sm:$0xff]
        %v364 = vld [vmem:[#allocation7 + $0xbc] sm:$0xff]
        %v365 = vld [vmem:[#allocation7 + $0xc4] sm:$0xff]
        %v366 = vld [vmem:[#allocation7 + $0xcc] sm:$0xff]
        %v367 = vld [vmem:[#allocation7 + $0xd8] sm:$0xff]
        %v368 = vld [vmem:[#allocation7 + $0xe0] sm:$0xff]
        %v369 = vld [vmem:[#allocation7 + $0xe8] sm:$0xff]
        %v370 = vld [vmem:[#allocation7 + $0xf0] sm:$0xff]
        %v371 = vld [vmem:[#allocation7 + $0xfc] sm:$0xff]
        %v372 = vld [vmem:[#allocation7 + $0x104] sm:$0xff]
        %v373 = vld [vmem:[#allocation7 + $0x10c] sm:$0xff]
        %v374 = vld [vmem:[#allocation7 + $0x114] sm:$0xff]
        %v375 = vld [vmem:[#allocation7 + $0x120] sm:$0xff]
        %v376 = vld [vmem:[#allocation7 + $0x128] sm:$0xff]
        %v377 = vld [vmem:[#allocation7 + $0x130] sm:$0xff]
        %v378 = vld [vmem:[#allocation7 + $0x138] sm:$0xff]
        %v379 = vld [vmem:[#allocation7 + $0x144] sm:$0xff]
        %v380 = vld [vmem:[#allocation7 + $0x14c] sm:$0xff]
        %v381 = vld [vmem:[#allocation7 + $0x154] sm:$0xff]
        %v382 = vld [vmem:[#allocation7 + $0x15c] sm:$0xff]
        %v383 = vld [vmem:[#allocation7 + $0x168] sm:$0xff]
        %v384 = vld [vmem:[#allocation7 + $0x170] sm:$0xff]
        %v385 = vld [vmem:[#allocation7 + $0x178] sm:$0xff]
        %v386 = vld [vmem:[#allocation7 + $0x180] sm:$0xff]
        %v387 = vld [vmem:[#allocation7 + $0x18c] sm:$0xff]
        %v388 = vld [vmem:[#allocation7 + $0x194] sm:$0xff]
        %v389 = vld [vmem:[#allocation7 + $0x19c] sm:$0xff]
        %v390 = vld [vmem:[#allocation7 + $0x1a4] sm:$0xff]
        %v391 = vld [vmem:[#allocation7 + $0x1b0] sm:$0x11]
        %v392 = vld [vmem:[#allocation7 + $0x1b8] sm:$0x11]
        %v393 = vld [vmem:[#allocation7 + $0x1c0] sm:$0x11]
        %v394 = vld [vmem:[#allocation7 + $0x1c8] sm:$0x11]
        %v395 = vunpack.c.l.bf16 %v391
        %v396 = vunpack.c.h.bf16 %v391
        %v397 = vunpack.c.h.bf16 %v392
        %v398 = vunpack.c.l.bf16 %v393
        %v399 = vunpack.c.l.bf16 %v394
        %v400 = vunpack.c.h.bf16 %v394
        %v401 = vld [vmem:[%s232] sm:$0xff]
        %v402 = vpack.c.bf16 %v401, %v401
        %v416 = vunpack.c.l.b16 %v280
        %v417 = vunpack.c.l.b16 %v281
        %v418 = vunpack.c.l.b16 %v282
        %v419 = vunpack.c.l.b16 %v283
        %v420 = vunpack.c.l.b16 %v284
        %v421 = vunpack.c.l.b16 %v285
        %v422 = vunpack.c.l.b16 %v286
        %v423 = vunpack.c.l.b16 %v287
        %v424 = vunpack.c.l.b16 %v288
        %v425 = vunpack.c.l.b16 %v289
        %v426 = vunpack.c.l.b16 %v290
        %v427 = vunpack.c.l.b16 %v291
        %v428 = vunpack.c.l.b16 %v292
        %v429 = vpack.c.b16 %v417, %v416
        %v430 = vpack.c.b16 %v419, %v418
        %v431 = vpack.c.b16 %v421, %v420
        %v432 = vpack.c.b16 %v423, %v422
        %v433 = vpack.c.b16 %v425, %v424
        %v434 = vpack.c.b16 %v427, %v426
        %v435 = vpack.c.b16 %v428, %v428
        %436 = vrot.lane.b32.xlu0 %v429, 96
        %v437 = vpop.permute.xlu0 %436
        %438 = vrot.lane.b32.xlu0 %v430, 96
        %v439 = vpop.permute.xlu0 %438
        %440 = vrot.lane.b32.xlu0 %v431, 96
        %v441 = vpop.permute.xlu0 %440
        %442 = vrot.lane.b32.xlu0 %v432, 96
        %v443 = vpop.permute.xlu0 %442
        %444 = vrot.lane.b32.xlu0 %v433, 96
        %v445 = vpop.permute.xlu0 %444
        %446 = vrot.lane.b32.xlu0 %v434, 96
        %v447 = vpop.permute.xlu0 %446
        %448 = vrot.lane.b32.xlu0 %v435, 96
        %v449 = vpop.permute.xlu0 %448
        %vm456 = vcmask 793600
        %v458 = vsel %vm456, %v402, 0
        %vm460 = vcmask 1040384
        %v461 = vsel 0, 4294967295, 65535
        %v462 = vsel %vm460, %v461, 0
        %v464 = vand.u32 %v449, %v462
        %466 = vmatprep.subr.bf16.mxu0 0
        %467 = vmatpush1.bf16.msra.mxu0 %v437
        %468 = vmatprep.subr.bf16.mxu0 0
        %469 = vmatpush1.bf16.msra.mxu0 %v439
        %470 = vmatprep.subr.bf16.mxu0 0
        %471 = vmatpush1.bf16.msra.mxu0 %v441
        %472 = vmatprep.subr.bf16.mxu0 0
        %473 = vmatpush1.bf16.msra.mxu0 %v443
        %474 = vmatprep.subr.bf16.mxu0 0
        %475 = vmatpush1.bf16.msra.mxu0 %v445
        %476 = vmatprep.subr.bf16.mxu0 0
        %477 = vmatpush1.bf16.msra.mxu0 %v447
        %478 = vmatprep.subr.bf16.mxu0 0
        %479 = vmatpush1.bf16.msra.mxu0 %v464
        %480 = vmatprep.subr.bf16.mxu0 0
        %481 = vmatpush1.bf16.msra.mxu0 0
        %482 = vmatprep.subr.bf16.mxu0 0
        %483 = vmatpush1.bf16.msra.mxu0 0
        %484 = vmatprep.subr.bf16.mxu0 0
        %485 = vmatpush1.bf16.msra.mxu0 0
        %486 = vmatprep.subr.bf16.mxu0 0
        %487 = vmatpush1.bf16.msra.mxu0 0
        %488 = vmatprep.subr.bf16.mxu0 0
        %489 = vmatpush1.bf16.msra.mxu0 0
        %490 = vmatprep.subr.bf16.mxu0 0
        %491 = vmatpush1.bf16.msra.mxu0 0
        %492 = vmatprep.subr.bf16.mxu0 0
        %493 = vmatpush1.bf16.msra.mxu0 0
        %494 = vmatprep.subr.bf16.mxu0 0
        %495 = vmatpush1.bf16.msra.mxu0 0
        %496 = vmatprep.subr.bf16.mxu0 0
        %497 = vmatpush1.bf16.msra.mxu0 0
        %498 = vmatprep.mubr.bf16.mxu0 0
        %499 = vmatmul.mubr.bf16.gmra.mrb[0].mxu0 %v458
        %v500 = vpop.f32.mrb[0].mxu0
        %v501 = vadd.f32 0.0, %v500
        %v502 = vpop.f32.mrb[0].mxu0
        %v503 = vpop.f32.mrb[0].mxu0
        %v504 = vpop.f32.mrb[0].mxu0
        %505 = vdwg.mxu0
        %v506 = vld [vmem:[%s241] sm:$0xff]
        %v507 = vpack.c.bf16 %v506, %v506
        %508 = vrot.lane.b32.xlu0 %v429, 64
        %v509 = vpop.permute.xlu0 %508
        %510 = vrot.lane.b32.xlu0 %v430, 64
        %v511 = vpop.permute.xlu0 %510
        %512 = vrot.lane.b32.xlu0 %v431, 64
        %v513 = vpop.permute.xlu0 %512
        %514 = vrot.lane.b32.xlu0 %v432, 64
        %v515 = vpop.permute.xlu0 %514
        %516 = vrot.lane.b32.xlu0 %v433, 64
        %v517 = vpop.permute.xlu0 %516
        %518 = vrot.lane.b32.xlu0 %v434, 64
        %v519 = vpop.permute.xlu0 %518
        %520 = vrot.lane.b32.xlu0 %v435, 64
        %v521 = vpop.permute.xlu0 %520
        %v529 = vsel %vm456, %v507, 0
        %v532 = vand.u32 %v521, %v462
        %534 = vmatprep.subr.bf16.mxu0 0
        %535 = vmatpush1.bf16.msra.mxu0 %v509
        %536 = vmatprep.subr.bf16.mxu0 0
        %537 = vmatpush1.bf16.msra.mxu0 %v511
        %538 = vmatprep.subr.bf16.mxu0 0
        %539 = vmatpush1.bf16.msra.mxu0 %v513
        %540 = vmatprep.subr.bf16.mxu0 0
        %541 = vmatpush1.bf16.msra.mxu0 %v515
        %542 = vmatprep.subr.bf16.mxu0 0
        %543 = vmatpush1.bf16.msra.mxu0 %v517
        %544 = vmatprep.subr.bf16.mxu0 0
        %545 = vmatpush1.bf16.msra.mxu0 %v519
        %546 = vmatprep.subr.bf16.mxu0 0
        %547 = vmatpush1.bf16.msra.mxu0 %v532
        %548 = vmatprep.subr.bf16.mxu0 0
        %549 = vmatpush1.bf16.msra.mxu0 0
        %550 = vmatprep.subr.bf16.mxu0 0
        %551 = vmatpush1.bf16.msra.mxu0 0
        %552 = vmatprep.subr.bf16.mxu0 0
        %553 = vmatpush1.bf16.msra.mxu0 0
        %554 = vmatprep.subr.bf16.mxu0 0
        %555 = vmatpush1.bf16.msra.mxu0 0
        %556 = vmatprep.subr.bf16.mxu0 0
        %557 = vmatpush1.bf16.msra.mxu0 0
        %558 = vmatprep.subr.bf16.mxu0 0
        %559 = vmatpush1.bf16.msra.mxu0 0
        %560 = vmatprep.subr.bf16.mxu0 0
        %561 = vmatpush1.bf16.msra.mxu0 0
        %562 = vmatprep.subr.bf16.mxu0 0
        %563 = vmatpush1.bf16.msra.mxu0 0
        %564 = vmatprep.subr.bf16.mxu0 0
        %565 = vmatpush1.bf16.msra.mxu0 0
        %566 = vmatprep.mubr.bf16.mxu0 0
        %567 = vmatmul.mubr.bf16.gmra.mrb[0].mxu0 %v529
        %v568 = vpop.f32.mrb[0].mxu0
        %v569 = vadd.f32 0.0, %v568
        %v570 = vpop.f32.mrb[0].mxu0
        %v571 = vpop.f32.mrb[0].mxu0
        %v572 = vpop.f32.mrb[0].mxu0
        %573 = vdwg.mxu0
        %574 = vxpose.xlu0.b32.start [1/16] %v501, 128
        %575 = vxpose.xlu0.b32.cont [2/16] 0.0, 128
        %576 = vxpose.xlu0.b32.cont [3/16] 0.0, 128
        %577 = vxpose.xlu0.b32.cont [4/16] 0.0, 128
        %578 = vxpose.xlu0.b32.cont [5/16] 0.0, 128
        %579 = vxpose.xlu0.b32.cont [6/16] 0.0, 128
        %580 = vxpose.xlu0.b32.cont [7/16] 0.0, 128
        %581 = vxpose.xlu0.b32.cont [8/16] 0.0, 128
        %582 = vxpose.xlu0.b32.cont [9/16] 0.0, 128
        %583 = vxpose.xlu0.b32.cont [10/16] 0.0, 128
        %584 = vxpose.xlu0.b32.cont [11/16] 0.0, 128
        %585 = vxpose.xlu0.b32.cont [12/16] 0.0, 128
        %586 = vxpose.xlu0.b32.cont [13/16] 0.0, 128
        %587 = vxpose.xlu0.b32.cont [14/16] 0.0, 128
        %588 = vxpose.xlu0.b32.cont [15/16] 0.0, 128
        %589 = vxpose.xlu0.b32.end [16/16] 0.0, 128
        %v590 = vpop.trf.xlu0
        %v591 = vpop.trf.xlu0
        %v592 = vpop.trf.xlu0
        %v593 = vpop.trf.xlu0
        %v594 = vpop.trf.xlu0
        %v595 = vpop.trf.xlu0
        %v596 = vpop.trf.xlu0
        %v597 = vpop.trf.xlu0
        %v598 = vpop.trf.xlu0
        %v599 = vpop.trf.xlu0
        %v600 = vpop.trf.xlu0
        %v601 = vpop.trf.xlu0
        %v602 = vpop.trf.xlu0
        %v603 = vpop.trf.xlu0
        %v604 = vpop.trf.xlu0
        %v605 = vpop.trf.xlu0
        %v606 = vpack.c.bf16 %v591, %v590
        %v607 = vpack.c.bf16 %v593, %v592
        %v608 = vpack.c.bf16 %v569, %v569
        %vm609 = vcmask 64512
        %v611 = vsel %vm609, %v606, 0
        %v614 = vsel %vm609, %v607, 0
        %vm616 = vcmask 1043456
        %v618 = vsel %vm616, %v608, 0
        %620 = vmatprep.subr.bf16.mxu0 0
        %621 = vmatpush1.bf16.msra.mxu0 %v618
        %622 = vmatprep.subr.bf16.mxu0 0
        %623 = vmatpush1.bf16.msra.mxu0 0
        %624 = vmatprep.subr.bf16.mxu0 0
        %625 = vmatpush1.bf16.msra.mxu0 0
        %626 = vmatprep.subr.bf16.mxu0 0
        %627 = vmatpush1.bf16.msra.mxu0 0
        %628 = vmatprep.subr.bf16.mxu0 0
        %629 = vmatpush1.bf16.msra.mxu0 0
        %630 = vmatprep.subr.bf16.mxu0 0
        %631 = vmatpush1.bf16.msra.mxu0 0
        %632 = vmatprep.subr.bf16.mxu0 0
        %633 = vmatpush1.bf16.msra.mxu0 0
        %634 = vmatprep.subr.bf16.mxu0 0
        %635 = vmatpush1.bf16.msra.mxu0 0
        %636 = vmatprep.subr.bf16.mxu0 0
        %637 = vmatpush1.bf16.msra.mxu0 0
        %638 = vmatprep.subr.bf16.mxu0 0
        %639 = vmatpush1.bf16.msra.mxu0 0
        %640 = vmatprep.subr.bf16.mxu0 0
        %641 = vmatpush1.bf16.msra.mxu0 0
        %642 = vmatprep.subr.bf16.mxu0 0
        %643 = vmatpush1.bf16.msra.mxu0 0
        %644 = vmatprep.subr.bf16.mxu0 0
        %645 = vmatpush1.bf16.msra.mxu0 0
        %646 = vmatprep.subr.bf16.mxu0 0
        %647 = vmatpush1.bf16.msra.mxu0 0
        %648 = vmatprep.subr.bf16.mxu0 0
        %649 = vmatpush1.bf16.msra.mxu0 0
        %650 = vmatprep.subr.bf16.mxu0 0
        %651 = vmatpush1.bf16.msra.mxu0 0
        %652 = vmatprep.mubr.bf16.mxu0 0
        %653 = vmatmul.mubr.bf16.gmra.mrb[0].mxu0 %v611
        %v654 = vpop.f32.mrb[0].mxu0
        %v655 = vadd.f32 0.0, %v654
        %v656 = vpop.f32.mrb[0].mxu0
        %v657 = vpop.f32.mrb[0].mxu0
        %v658 = vadd.f32 0.0, %v657
        %v659 = vpop.f32.mrb[0].mxu0
        %660 = vmatprep.mubr.bf16.mxu0 0
        %661 = vmatmul.mubr.bf16.gmra.mrb[0].mxu0 %v614
        %v662 = vpop.f32.mrb[0].mxu0
        %v663 = vadd.f32 0.0, %v662
        %v664 = vpop.f32.mrb[0].mxu0
        %v665 = vpop.f32.mrb[0].mxu0
        %v666 = vadd.f32 0.0, %v665
        %v667 = vpop.f32.mrb[0].mxu0
        %668 = vdwg.mxu0
        %vm673 = vcmask 1046528
        %v674 = vrot.slane %v655, 1
        %v675 = vrot.slane %v658, 1
        %v676 = vsel %vm673, %v674, %v675
        %v677 = vrot.slane %v663, 1
        %v678 = vsel %vm673, %v675, %v677
        %v679 = vrot.slane %v666, 1
        %v680 = vsel %vm673, %v677, %v679
        %v682 = vsel %vm673, %v679, 0.0
        %vm683 = vcmask 1045504
        %v684 = vrot.slane %v655, 2
        %v685 = vrot.slane %v658, 2
        %v686 = vsel %vm683, %v684, %v685
        %v687 = vrot.slane %v663, 2
        %v688 = vsel %vm683, %v685, %v687
        %v689 = vrot.slane %v666, 2
        %v690 = vsel %vm683, %v687, %v689
        %v692 = vsel %vm683, %v689, 0.0
        %694 = vrot.lane.b32.xlu0 %v676, 32
        %v695 = vpop.permute.xlu0 %694
        %696 = vrot.lane.b32.xlu0 %v678, 32
        %v697 = vpop.permute.xlu0 %696
        %698 = vrot.lane.b32.xlu0 %v680, 32
        %v699 = vpop.permute.xlu0 %698
        %700 = vrot.lane.b32.xlu0 %v682, 32
        %v701 = vpop.permute.xlu0 %700
        %707 = vrot.lane.b32.xlu0 %v686, 64
        %v708 = vpop.permute.xlu0 %707
        %709 = vrot.lane.b32.xlu0 %v688, 64
        %v710 = vpop.permute.xlu0 %709
        %711 = vrot.lane.b32.xlu0 %v690, 64
        %v712 = vpop.permute.xlu0 %711
        %713 = vrot.lane.b32.xlu0 %v692, 64
        %v714 = vpop.permute.xlu0 %713
        %vm719 = vcmask 261120
        %v720 = vsel %vm719, %v655, %v695
        %v721 = vsel %vm719, %v658, %v697
        %v722 = vsel %vm719, %v663, %v699
        %v723 = vsel %vm719, %v666, %v701
        %vm724 = vcmask 523264
        %v725 = vsel %vm724, %v720, %v708
        %v726 = vsel %vm724, %v721, %v710
        %v727 = vsel %vm724, %v722, %v712
        %v728 = vsel %vm724, %v723, %v714
        %v729 = vpack.c.bf16 %v726, %v725
        %v730 = vpack.c.bf16 %v728, %v727
        %v731 = vlaneseq
        %v732 = vshrl.u32 %v731, 7
        %v733 = vsub.s32 0, %v732
        %v734 = vrot.slane %v395, %v733
        %v735 = vlaneseq
        %v736 = vshrl.u32 %v735, 7
        %v737 = vsub.s32 0, %v736
        %v738 = vrot.slane %v396, %v737
        %v739 = vlaneseq
        %v740 = vshrl.u32 %v739, 7
        %v741 = vsub.s32 0, %v740
        %v742 = vrot.slane %v397, %v741
        %v743 = vlaneseq
        %v744 = vshrl.u32 %v743, 7
        %v745 = vsub.s32 0, %v744
        %v746 = vrot.slane %v398, %v745
        %v747 = vlaneseq
        %v748 = vshrl.u32 %v747, 7
        %v749 = vsub.s32 0, %v748
        %v750 = vrot.slane %v399, %v749
        %v751 = vlaneseq
        %v752 = vshrl.u32 %v751, 7
        %v753 = vsub.s32 0, %v752
        %v754 = vrot.slane %v400, %v753
        %v803 = vunpack.c.l.b16 %v343
        %v804 = vunpack.c.h.b16 %v343
        %v805 = vunpack.c.l.b16 %v344
        %v806 = vunpack.c.h.b16 %v344
        %v807 = vunpack.c.l.b16 %v345
        %v808 = vunpack.c.h.b16 %v345
        %v809 = vunpack.c.l.b16 %v346
        %v810 = vunpack.c.h.b16 %v346
        %v811 = vunpack.c.l.b16 %v347
        %v812 = vunpack.c.h.b16 %v347
        %v813 = vunpack.c.l.b16 %v348
        %v814 = vunpack.c.h.b16 %v348
        %v815 = vunpack.c.l.b16 %v349
        %v816 = vunpack.c.h.b16 %v349
        %v817 = vunpack.c.l.b16 %v350
        %v818 = vunpack.c.h.b16 %v350
        %v819 = vunpack.c.l.b16 %v351
        %v820 = vunpack.c.h.b16 %v351
        %v821 = vunpack.c.l.b16 %v352
        %v822 = vunpack.c.h.b16 %v352
        %v823 = vunpack.c.l.b16 %v353
        %v824 = vunpack.c.h.b16 %v353
        %v825 = vunpack.c.l.b16 %v354
        %v826 = vunpack.c.h.b16 %v354
        %v827 = vunpack.c.l.b16 %v355
        %v828 = vunpack.c.h.b16 %v355
        %v829 = vunpack.c.l.b16 %v356
        %v830 = vunpack.c.h.b16 %v356
        %v831 = vunpack.c.l.b16 %v357
        %v832 = vunpack.c.h.b16 %v357
        %v833 = vunpack.c.l.b16 %v358
        %v834 = vunpack.c.h.b16 %v358
        %v835 = vunpack.c.l.b16 %v359
        %v836 = vunpack.c.h.b16 %v359
        %v837 = vunpack.c.l.b16 %v360
        %v838 = vunpack.c.h.b16 %v360
        %v839 = vunpack.c.l.b16 %v361
        %v840 = vunpack.c.h.b16 %v361
        %v841 = vunpack.c.l.b16 %v362
        %v842 = vunpack.c.h.b16 %v362
        %v843 = vunpack.c.l.b16 %v363
        %v844 = vunpack.c.h.b16 %v363
        %v845 = vunpack.c.l.b16 %v364
        %v846 = vunpack.c.h.b16 %v364
        %v847 = vunpack.c.l.b16 %v365
        %v848 = vunpack.c.h.b16 %v365
        %v849 = vunpack.c.l.b16 %v366
        %v850 = vunpack.c.h.b16 %v366
        %v851 = vunpack.c.l.b16 %v367
        %v852 = vunpack.c.h.b16 %v367
        %v853 = vunpack.c.l.b16 %v368
        %v854 = vunpack.c.h.b16 %v368
        %v855 = vunpack.c.l.b16 %v369
        %v856 = vunpack.c.h.b16 %v369
        %v857 = vunpack.c.l.b16 %v370
        %v858 = vunpack.c.h.b16 %v370
        %v859 = vunpack.c.l.b16 %v371
        %v860 = vunpack.c.h.b16 %v371
        %v861 = vunpack.c.l.b16 %v372
        %v862 = vunpack.c.h.b16 %v372
        %v863 = vunpack.c.l.b16 %v373
        %v864 = vunpack.c.h.b16 %v373
        %v865 = vunpack.c.l.b16 %v374
        %v866 = vunpack.c.h.b16 %v374
        %v867 = vunpack.c.l.b16 %v375
        %v868 = vunpack.c.h.b16 %v375
        %v869 = vunpack.c.l.b16 %v376
        %v870 = vunpack.c.h.b16 %v376
        %v871 = vunpack.c.l.b16 %v377
        %v872 = vunpack.c.h.b16 %v377
        %v873 = vunpack.c.l.b16 %v378
        %v874 = vunpack.c.h.b16 %v378
        %v875 = vunpack.c.l.b16 %v379
        %v876 = vunpack.c.h.b16 %v379
        %v877 = vunpack.c.l.b16 %v380
        %v878 = vunpack.c.h.b16 %v380
        %v879 = vunpack.c.l.b16 %v381
        %v880 = vunpack.c.h.b16 %v381
        %v881 = vunpack.c.l.b16 %v382
        %v882 = vunpack.c.h.b16 %v382
        %v883 = vunpack.c.l.b16 %v383
        %v884 = vunpack.c.h.b16 %v383
        %v885 = vunpack.c.l.b16 %v384
        %v886 = vunpack.c.h.b16 %v384
        %v887 = vunpack.c.l.b16 %v385
        %v888 = vunpack.c.h.b16 %v385
        %v889 = vunpack.c.l.b16 %v386
        %v890 = vunpack.c.h.b16 %v386
        %v891 = vunpack.c.l.b16 %v387
        %v892 = vunpack.c.h.b16 %v387
        %v893 = vunpack.c.l.b16 %v388
        %v894 = vunpack.c.h.b16 %v388
        %v895 = vunpack.c.l.b16 %v389
        %v896 = vunpack.c.h.b16 %v389
        %v897 = vunpack.c.l.b16 %v390
        %v898 = vunpack.c.h.b16 %v390
        %v899 = vpack.c.b16 %v811, %v803
        %v900 = vpack.c.b16 %v812, %v804
        %v901 = vpack.c.b16 %v813, %v805
        %v902 = vpack.c.b16 %v814, %v806
        %v903 = vpack.c.b16 %v815, %v807
        %v904 = vpack.c.b16 %v816, %v808
        %v905 = vpack.c.b16 %v817, %v809
        %v906 = vpack.c.b16 %v818, %v810
        %v907 = vpack.c.b16 %v827, %v819
        %v908 = vpack.c.b16 %v828, %v820
        %v909 = vpack.c.b16 %v829, %v821
        %v910 = vpack.c.b16 %v830, %v822
        %v911 = vpack.c.b16 %v831, %v823
        %v912 = vpack.c.b16 %v832, %v824
        %v913 = vpack.c.b16 %v833, %v825
        %v914 = vpack.c.b16 %v834, %v826
        %v915 = vpack.c.b16 %v843, %v835
        %v916 = vpack.c.b16 %v844, %v836
        %v917 = vpack.c.b16 %v845, %v837
        %v918 = vpack.c.b16 %v846, %v838
        %v919 = vpack.c.b16 %v847, %v839
        %v920 = vpack.c.b16 %v848, %v840
        %v921 = vpack.c.b16 %v849, %v841
        %v922 = vpack.c.b16 %v850, %v842
        %v923 = vpack.c.b16 %v859, %v851
        %v924 = vpack.c.b16 %v860, %v852
        %v925 = vpack.c.b16 %v861, %v853
        %v926 = vpack.c.b16 %v862, %v854
        %v927 = vpack.c.b16 %v863, %v855
        %v928 = vpack.c.b16 %v864, %v856
        %v929 = vpack.c.b16 %v865, %v857
        %v930 = vpack.c.b16 %v866, %v858
        %v931 = vpack.c.b16 %v875, %v867
        %v932 = vpack.c.b16 %v876, %v868
        %v933 = vpack.c.b16 %v877, %v869
        %v934 = vpack.c.b16 %v878, %v870
        %v935 = vpack.c.b16 %v879, %v871
        %v936 = vpack.c.b16 %v880, %v872
        %v937 = vpack.c.b16 %v881, %v873
        %v938 = vpack.c.b16 %v882, %v874
        %v939 = vpack.c.b16 %v891, %v883
        %v940 = vpack.c.b16 %v892, %v884
        %v941 = vpack.c.b16 %v893, %v885
        %v942 = vpack.c.b16 %v894, %v886
        %v943 = vpack.c.b16 %v895, %v887
        %v944 = vpack.c.b16 %v896, %v888
        %v945 = vpack.c.b16 %v897, %v889
        %v946 = vpack.c.b16 %v898, %v890
        %vm995 = vcmask 785408
        %v997 = vsel %vm995, %v729, 0
        %v1000 = vsel %vm995, %v730, 0
        %1002 = vmatprep.subr.bf16.mxu0 %v900
        %1003 = vmatpush1.bf16.msra.mxu0 %v899
        %1004 = vmatprep.subr.bf16.mxu0 %v908
        %1005 = vmatpush1.bf16.msra.mxu0 %v907
        %1006 = vmatprep.subr.bf16.mxu0 %v916
        %1007 = vmatpush1.bf16.msra.mxu0 %v915
        %1008 = vmatprep.subr.bf16.mxu0 %v924
        %1009 = vmatpush1.bf16.msra.mxu0 %v923
        %1010 = vmatprep.subr.bf16.mxu0 %v932
        %1011 = vmatpush1.bf16.msra.mxu0 %v931
        %1012 = vmatprep.subr.bf16.mxu0 %v940
        %1013 = vmatpush1.bf16.msra.mxu0 %v939
        %1014 = vmatprep.subr.bf16.mxu0 0
        %1015 = vmatpush1.bf16.msra.mxu0 0
        %1016 = vmatprep.subr.bf16.mxu0 0
        %1017 = vmatpush1.bf16.msra.mxu0 0
        %1018 = vmatprep.subr.bf16.mxu0 0
        %1019 = vmatpush1.bf16.msra.mxu0 0
        %1020 = vmatprep.subr.bf16.mxu0 0
        %1021 = vmatpush1.bf16.msra.mxu0 0
        %1022 = vmatprep.subr.bf16.mxu0 0
        %1023 = vmatpush1.bf16.msra.mxu0 0
        %1024 = vmatprep.subr.bf16.mxu0 0
        %1025 = vmatpush1.bf16.msra.mxu0 0
        %1026 = vmatprep.subr.bf16.mxu0 0
        %1027 = vmatpush1.bf16.msra.mxu0 0
        %1028 = vmatprep.subr.bf16.mxu0 0
        %1029 = vmatpush1.bf16.msra.mxu0 0
        %1030 = vmatprep.subr.bf16.mxu0 0
        %1031 = vmatpush1.bf16.msra.mxu0 0
        %1032 = vmatprep.subr.bf16.mxu0 0
        %1033 = vmatpush1.bf16.msra.mxu0 0
        %1034 = vmatprep.mubr.bf16.mxu0 0
        %1035 = vmatmul.mubr.bf16.gmra.mrb[0].mxu0 %v997
        %v1036 = vpop.f32.mrb[0].mxu0
        %v1037 = vadd.f32 %v734, %v1036
        %v1038 = vpop.f32.mrb[0].mxu0
        %v1039 = vadd.f32 %v738, %v1038
        %v1040 = vpop.f32.mrb[0].mxu0
        %v1041 = vadd.f32 %v734, %v1040
        %v1042 = vpop.f32.mrb[0].mxu0
        %v1043 = vadd.f32 %v738, %v1042
        %1044 = vmatprep.mubr.bf16.mxu0 0
        %1045 = vmatmul.mubr.bf16.gmra.mrb[0].mxu0 %v1000
        %v1046 = vpop.f32.mrb[0].mxu0
        %v1047 = vadd.f32 %v734, %v1046
        %v1048 = vpop.f32.mrb[0].mxu0
        %v1049 = vadd.f32 %v738, %v1048
        %v1050 = vpop.f32.mrb[0].mxu0
        %v1051 = vadd.f32 %v734, %v1050
        %v1052 = vpop.f32.mrb[0].mxu0
        %v1053 = vadd.f32 %v738, %v1052
        %1054 = vdwg.mxu0
        %1055 = vmatprep.subr.bf16.mxu0 %v902
        %1056 = vmatpush1.bf16.msra.mxu0 %v901
        %1057 = vmatprep.subr.bf16.mxu0 %v910
        %1058 = vmatpush1.bf16.msra.mxu0 %v909
        %1059 = vmatprep.subr.bf16.mxu0 %v918
        %1060 = vmatpush1.bf16.msra.mxu0 %v917
        %1061 = vmatprep.subr.bf16.mxu0 %v926
        %1062 = vmatpush1.bf16.msra.mxu0 %v925
        %1063 = vmatprep.subr.bf16.mxu0 %v934
        %1064 = vmatpush1.bf16.msra.mxu0 %v933
        %1065 = vmatprep.subr.bf16.mxu0 %v942
        %1066 = vmatpush1.bf16.msra.mxu0 %v941
        %1067 = vmatprep.subr.bf16.mxu0 0
        %1068 = vmatpush1.bf16.msra.mxu0 0
        %1069 = vmatprep.subr.bf16.mxu0 0
        %1070 = vmatpush1.bf16.msra.mxu0 0
        %1071 = vmatprep.subr.bf16.mxu0 0
        %1072 = vmatpush1.bf16.msra.mxu0 0
        %1073 = vmatprep.subr.bf16.mxu0 0
        %1074 = vmatpush1.bf16.msra.mxu0 0
        %1075 = vmatprep.subr.bf16.mxu0 0
        %1076 = vmatpush1.bf16.msra.mxu0 0
        %1077 = vmatprep.subr.bf16.mxu0 0
        %1078 = vmatpush1.bf16.msra.mxu0 0
        %1079 = vmatprep.subr.bf16.mxu0 0
        %1080 = vmatpush1.bf16.msra.mxu0 0
        %1081 = vmatprep.subr.bf16.mxu0 0
        %1082 = vmatpush1.bf16.msra.mxu0 0
        %1083 = vmatprep.subr.bf16.mxu0 0
        %1084 = vmatpush1.bf16.msra.mxu0 0
        %1085 = vmatprep.subr.bf16.mxu0 0
        %1086 = vmatpush1.bf16.msra.mxu0 0
        %1087 = vmatprep.mubr.bf16.mxu0 0
        %1088 = vmatmul.mubr.bf16.gmra.mrb[0].mxu0 %v997
        %v1089 = vpop.f32.mrb[0].mxu0
        %v1090 = vpop.f32.mrb[0].mxu0
        %v1091 = vadd.f32 %v742, %v1090
        %v1092 = vpop.f32.mrb[0].mxu0
        %v1093 = vpop.f32.mrb[0].mxu0
        %v1094 = vadd.f32 %v742, %v1093
        %1095 = vmatprep.mubr.bf16.mxu0 0
        %1096 = vmatmul.mubr.bf16.gmra.mrb[0].mxu0 %v1000
        %v1097 = vpop.f32.mrb[0].mxu0
        %v1098 = vpop.f32.mrb[0].mxu0
        %v1099 = vadd.f32 %v742, %v1098
        %v1100 = vpop.f32.mrb[0].mxu0
        %v1101 = vpop.f32.mrb[0].mxu0
        %v1102 = vadd.f32 %v742, %v1101
        %1103 = vdwg.mxu0
        %1104 = vmatprep.subr.bf16.mxu0 %v904
        %1105 = vmatpush1.bf16.msra.mxu0 %v903
        %1106 = vmatprep.subr.bf16.mxu0 %v912
        %1107 = vmatpush1.bf16.msra.mxu0 %v911
        %1108 = vmatprep.subr.bf16.mxu0 %v920
        %1109 = vmatpush1.bf16.msra.mxu0 %v919
        %1110 = vmatprep.subr.bf16.mxu0 %v928
        %1111 = vmatpush1.bf16.msra.mxu0 %v927
        %1112 = vmatprep.subr.bf16.mxu0 %v936
        %1113 = vmatpush1.bf16.msra.mxu0 %v935
        %1114 = vmatprep.subr.bf16.mxu0 %v944
        %1115 = vmatpush1.bf16.msra.mxu0 %v943
        %1116 = vmatprep.subr.bf16.mxu0 0
        %1117 = vmatpush1.bf16.msra.mxu0 0
        %1118 = vmatprep.subr.bf16.mxu0 0
        %1119 = vmatpush1.bf16.msra.mxu0 0
        %1120 = vmatprep.subr.bf16.mxu0 0
        %1121 = vmatpush1.bf16.msra.mxu0 0
        %1122 = vmatprep.subr.bf16.mxu0 0
        %1123 = vmatpush1.bf16.msra.mxu0 0
        %1124 = vmatprep.subr.bf16.mxu0 0
        %1125 = vmatpush1.bf16.msra.mxu0 0
        %1126 = vmatprep.subr.bf16.mxu0 0
        %1127 = vmatpush1.bf16.msra.mxu0 0
        %1128 = vmatprep.subr.bf16.mxu0 0
        %1129 = vmatpush1.bf16.msra.mxu0 0
        %1130 = vmatprep.subr.bf16.mxu0 0
        %1131 = vmatpush1.bf16.msra.mxu0 0
        %1132 = vmatprep.subr.bf16.mxu0 0
        %1133 = vmatpush1.bf16.msra.mxu0 0
        %1134 = vmatprep.subr.bf16.mxu0 0
        %1135 = vmatpush1.bf16.msra.mxu0 0
        %1136 = vmatprep.mubr.bf16.mxu0 0
        %1137 = vmatmul.mubr.bf16.gmra.mrb[0].mxu0 %v997
        %v1138 = vpop.f32.mrb[0].mxu0
        %v1139 = vadd.f32 %v746, %v1138
        %v1140 = vpop.f32.mrb[0].mxu0
        %v1141 = vpop.f32.mrb[0].mxu0
        %v1142 = vadd.f32 %v746, %v1141
        %v1143 = vpop.f32.mrb[0].mxu0
        %1144 = vmatprep.mubr.bf16.mxu0 0
        %1145 = vmatmul.mubr.bf16.gmra.mrb[0].mxu0 %v1000
        %v1146 = vpop.f32.mrb[0].mxu0
        %v1147 = vadd.f32 %v746, %v1146
        %v1148 = vpop.f32.mrb[0].mxu0
        %v1149 = vpop.f32.mrb[0].mxu0
        %v1150 = vadd.f32 %v746, %v1149
        %v1151 = vpop.f32.mrb[0].mxu0
        %1152 = vdwg.mxu0
        %1153 = vmatprep.subr.bf16.mxu0 %v906
        %1154 = vmatpush1.bf16.msra.mxu0 %v905
        %1155 = vmatprep.subr.bf16.mxu0 %v914
        %1156 = vmatpush1.bf16.msra.mxu0 %v913
        %1157 = vmatprep.subr.bf16.mxu0 %v922
        %1158 = vmatpush1.bf16.msra.mxu0 %v921
        %1159 = vmatprep.subr.bf16.mxu0 %v930
        %1160 = vmatpush1.bf16.msra.mxu0 %v929
        %1161 = vmatprep.subr.bf16.mxu0 %v938
        %1162 = vmatpush1.bf16.msra.mxu0 %v937
        %1163 = vmatprep.subr.bf16.mxu0 %v946
        %1164 = vmatpush1.bf16.msra.mxu0 %v945
        %1165 = vmatprep.subr.bf16.mxu0 0
        %1166 = vmatpush1.bf16.msra.mxu0 0
        %1167 = vmatprep.subr.bf16.mxu0 0
        %1168 = vmatpush1.bf16.msra.mxu0 0
        %1169 = vmatprep.subr.bf16.mxu0 0
        %1170 = vmatpush1.bf16.msra.mxu0 0
        %1171 = vmatprep.subr.bf16.mxu0 0
        %1172 = vmatpush1.bf16.msra.mxu0 0
        %1173 = vmatprep.subr.bf16.mxu0 0
        %1174 = vmatpush1.bf16.msra.mxu0 0
        %1175 = vmatprep.subr.bf16.mxu0 0
        %1176 = vmatpush1.bf16.msra.mxu0 0
        %1177 = vmatprep.subr.bf16.mxu0 0
        %1178 = vmatpush1.bf16.msra.mxu0 0
        %1179 = vmatprep.subr.bf16.mxu0 0
        %1180 = vmatpush1.bf16.msra.mxu0 0
        %1181 = vmatprep.subr.bf16.mxu0 0
        %1182 = vmatpush1.bf16.msra.mxu0 0
        %1183 = vmatprep.subr.bf16.mxu0 0
        %1184 = vmatpush1.bf16.msra.mxu0 0
        %1185 = vmatprep.mubr.bf16.mxu0 0
        %1186 = vmatmul.mubr.bf16.gmra.mrb[0].mxu0 %v997
        %v1187 = vpop.f32.mrb[0].mxu0
        %v1188 = vadd.f32 %v750, %v1187
        %v1189 = vpop.f32.mrb[0].mxu0
        %v1190 = vadd.f32 %v754, %v1189
        %v1191 = vpop.f32.mrb[0].mxu0
        %v1192 = vadd.f32 %v750, %v1191
        %v1193 = vpop.f32.mrb[0].mxu0
        %v1194 = vadd.f32 %v754, %v1193
        %1195 = vmatprep.mubr.bf16.mxu0 0
        %1196 = vmatmul.mubr.bf16.gmra.mrb[0].mxu0 %v1000
        %v1197 = vpop.f32.mrb[0].mxu0
        %v1198 = vadd.f32 %v750, %v1197
        %v1199 = vpop.f32.mrb[0].mxu0
        %v1200 = vadd.f32 %v754, %v1199
        %v1201 = vpop.f32.mrb[0].mxu0
        %v1202 = vadd.f32 %v750, %v1201
        %v1203 = vpop.f32.mrb[0].mxu0
        %v1204 = vadd.f32 %v754, %v1203
        %1205 = vdwg.mxu0
        %v1206 = vmax.f32 %v1037, 0.0
        %v1207 = vmax.f32 %v1039, 0.0
        %v1208 = vmax.f32 %v1091, 0.0
        %v1209 = vmax.f32 %v1139, 0.0
        %v1210 = vmax.f32 %v1188, 0.0
        %v1211 = vmax.f32 %v1190, 0.0
        %v1212 = vmax.f32 %v1041, 0.0
        %v1213 = vmax.f32 %v1043, 0.0
        %v1214 = vmax.f32 %v1094, 0.0
        %v1215 = vmax.f32 %v1142, 0.0
        %v1216 = vmax.f32 %v1192, 0.0
        %v1217 = vmax.f32 %v1194, 0.0
        %v1218 = vmax.f32 %v1047, 0.0
        %v1219 = vmax.f32 %v1049, 0.0
        %v1220 = vmax.f32 %v1099, 0.0
        %v1221 = vmax.f32 %v1147, 0.0
        %v1222 = vmax.f32 %v1198, 0.0
        %v1223 = vmax.f32 %v1200, 0.0
        %v1224 = vmax.f32 %v1051, 0.0
        %v1225 = vmax.f32 %v1053, 0.0
        %v1226 = vmax.f32 %v1102, 0.0
        %v1227 = vmax.f32 %v1150, 0.0
        %v1228 = vmax.f32 %v1202, 0.0
        %v1229 = vmax.f32 %v1204, 0.0
        %v1230 = vmax.f32 %v1206, %v1208
        %v1231 = vmax.f32 %v1207, %v1209
        %v1232 = vmax.f32 %v1212, %v1214
        %v1233 = vmax.f32 %v1213, %v1215
        %v1234 = vmax.f32 %v1218, %v1220
        %v1235 = vmax.f32 %v1219, %v1221
        %v1236 = vmax.f32 %v1224, %v1226
        %v1237 = vmax.f32 %v1225, %v1227
        %v1238 = vmax.f32 %v1230, %v1210
        %v1239 = vmax.f32 %v1231, %v1211
        %v1240 = vmax.f32 %v1232, %v1216
        %v1241 = vmax.f32 %v1233, %v1217
        %v1242 = vmax.f32 %v1234, %v1222
        %v1243 = vmax.f32 %v1235, %v1223
        %v1244 = vmax.f32 %v1236, %v1228
        %v1245 = vmax.f32 %v1237, %v1229
        %v1254 = vrot.slane %v1238, 1
        %v1255 = vrot.slane %v1240, 1
        %v1256 = vsel %vm673, %v1254, %v1255
        %v1257 = vrot.slane %v1239, 1
        %v1258 = vrot.slane %v1241, 1
        %v1259 = vsel %vm673, %v1257, %v1258
        %v1260 = vrot.slane %v1242, 1
        %v1261 = vsel %vm673, %v1255, %v1260
        %v1262 = vrot.slane %v1243, 1
        %v1263 = vsel %vm673, %v1258, %v1262
        %v1264 = vrot.slane %v1244, 1
        %v1265 = vsel %vm673, %v1260, %v1264
        %v1266 = vrot.slane %v1245, 1
        %v1267 = vsel %vm673, %v1262, %v1266
        %v1276 = vsel %vm673, %v1264, 0.0
        %v1277 = vsel %vm673, %v1266, 0.0
        %v1278 = vrot.slane %v1238, 2
        %v1279 = vrot.slane %v1240, 2
        %v1280 = vsel %vm683, %v1278, %v1279
        %v1281 = vrot.slane %v1239, 2
        %v1282 = vrot.slane %v1241, 2
        %v1283 = vsel %vm683, %v1281, %v1282
        %v1284 = vrot.slane %v1242, 2
        %v1285 = vsel %vm683, %v1279, %v1284
        %v1286 = vrot.slane %v1243, 2
        %v1287 = vsel %vm683, %v1282, %v1286
        %v1288 = vrot.slane %v1244, 2
        %v1289 = vsel %vm683, %v1284, %v1288
        %v1290 = vrot.slane %v1245, 2
        %v1291 = vsel %vm683, %v1286, %v1290
        %v1300 = vsel %vm683, %v1288, 0.0
        %v1301 = vsel %vm683, %v1290, 0.0
        %v1302 = vmax.f32 %v1238, %v1256
        %v1303 = vmax.f32 %v1239, %v1259
        %v1304 = vmax.f32 %v1240, %v1261
        %v1305 = vmax.f32 %v1241, %v1263
        %v1306 = vmax.f32 %v1242, %v1265
        %v1307 = vmax.f32 %v1243, %v1267
        %v1308 = vmax.f32 %v1244, %v1276
        %v1309 = vmax.f32 %v1245, %v1277
        %v1310 = vmax.f32 %v1302, %v1280
        %v1311 = vmax.f32 %v1303, %v1283
        %v1312 = vmax.f32 %v1304, %v1285
        %v1313 = vmax.f32 %v1305, %v1287
        %v1314 = vmax.f32 %v1306, %v1289
        %v1315 = vmax.f32 %v1307, %v1291
        %v1316 = vmax.f32 %v1308, %v1300
        %v1317 = vmax.f32 %v1309, %v1301
        %v1318 = vpack.c.bf16 %v1312, %v1310
        %v1319 = vpack.c.bf16 %v1313, %v1311
        %v1320 = vpack.c.bf16 %v1316, %v1314
        %v1321 = vpack.c.bf16 %v1317, %v1315
        %v1324 = vunpack.c.l.b16 %v333
        %v1325 = vunpack.c.l.b16 %v334
        %v1326 = vpack.c.b16 %v1325, %v1324
        %1327 = vrot.lane.b32.xlu0 %v1326, 96
        %v1328 = vpop.permute.xlu0 %1327
        %v1330 = vsel %vm719, %v1328, 0
        %1332 = vmatprep.subr.bf16.mxu0 %v1319
        %1333 = vmatpush1.bf16.msra.mxu0 %v1318
        %1334 = vmatprep.subr.bf16.mxu0 %v1321
        %1335 = vmatpush1.bf16.msra.mxu0 %v1320
        %1336 = vmatprep.subr.bf16.mxu0 0
        %1337 = vmatpush1.bf16.msra.mxu0 0
        %1338 = vmatprep.subr.bf16.mxu0 0
        %1339 = vmatpush1.bf16.msra.mxu0 0
        %1340 = vmatprep.subr.bf16.mxu0 0
        %1341 = vmatpush1.bf16.msra.mxu0 0
        %1342 = vmatprep.subr.bf16.mxu0 0
        %1343 = vmatpush1.bf16.msra.mxu0 0
        %1344 = vmatprep.subr.bf16.mxu0 0
        %1345 = vmatpush1.bf16.msra.mxu0 0
        %1346 = vmatprep.subr.bf16.mxu0 0
        %1347 = vmatpush1.bf16.msra.mxu0 0
        %1348 = vmatprep.subr.bf16.mxu0 0
        %1349 = vmatpush1.bf16.msra.mxu0 0
        %1350 = vmatprep.subr.bf16.mxu0 0
        %1351 = vmatpush1.bf16.msra.mxu0 0
        %1352 = vmatprep.subr.bf16.mxu0 0
        %1353 = vmatpush1.bf16.msra.mxu0 0
        %1354 = vmatprep.subr.bf16.mxu0 0
        %1355 = vmatpush1.bf16.msra.mxu0 0
        %1356 = vmatprep.subr.bf16.mxu0 0
        %1357 = vmatpush1.bf16.msra.mxu0 0
        %1358 = vmatprep.subr.bf16.mxu0 0
        %1359 = vmatpush1.bf16.msra.mxu0 0
        %1360 = vmatprep.subr.bf16.mxu0 0
        %1361 = vmatpush1.bf16.msra.mxu0 0
        %1362 = vmatprep.subr.bf16.mxu0 0
        %1363 = vmatpush1.bf16.msra.mxu0 0
        %1364 = vmatprep.mubr.bf16.mxu0 0
        %1365 = vmatmul.mubr.bf16.gmra.mrb[0].mxu0 %v1330
        %v1366 = vpop.f32.mrb[0].mxu0
        %v1367 = vadd.f32 0.0, %v1366
        %v1368 = vpop.f32.mrb[0].mxu0
        %v1369 = vadd.f32 0.0, %v1368
        %v1370 = vpop.f32.mrb[0].mxu0
        %v1371 = vadd.f32 0.0, %v1370
        %v1372 = vpop.f32.mrb[0].mxu0
        %v1373 = vadd.f32 0.0, %v1372
        %1374 = vdwg.mxu0
        %v1375 = vpack.c.bf16 %v1371, %v1367
        %v1376 = vpack.c.bf16 %v1373, %v1369
        %v1378 = vshrl.u32 %v1375, 16
        %v1380 = vshll.u32 %v1375, 16
        %v1382 = vrot.slane %v1380, 1
        %v1383 = vor.u32 %v1378, %v1382
        %1384 = vrot.lane.b32.xlu0 %v1383, 96
        %v1385 = vpop.permute.xlu0 %1384
        %v1387 = vrot.slane %v1375, 1
        %1388 = vrot.lane.b32.xlu0 %v1387, 64
        %v1389 = vpop.permute.xlu0 %1388
        %v1391 = vsel %vm995, %v1375, %v1385
        %v1393 = vsel %vm724, %v1385, %v1389
        %1394 = vrot.lane.b32.xlu0 %v1375, 96
        %v1395 = vpop.permute.xlu0 %1394
        %1396 = vrot.lane.b32.xlu0 %v1383, 64
        %v1397 = vpop.permute.xlu0 %1396
        %1398 = vrot.lane.b32.xlu0 %v1387, 32
        %v1399 = vpop.permute.xlu0 %1398
        %v1402 = vsel %vm995, %v1395, %v1397
        %v1404 = vsel %vm724, %v1397, %v1399
        %1406 = vrot.lane.b32.xlu0 %v1375, 64
        %v1407 = vpop.permute.xlu0 %1406
        %1408 = vrot.lane.b32.xlu0 %v1376, 64
        %v1409 = vpop.permute.xlu0 %1408
        %vm1410 = vcmask 523264
        %v1411 = vsel %vm1410, %v1407, %v1409
        %v1413 = vshrl.u32 %v1376, 16
        %v1415 = vshll.u32 %v1376, 16
        %v1417 = vrot.slane %v1415, 1
        %v1418 = vor.u32 %v1413, %v1417
        %1419 = vrot.lane.b32.xlu0 %v1383, 32
        %v1420 = vpop.permute.xlu0 %1419
        %1421 = vrot.lane.b32.xlu0 %v1418, 32
        %v1422 = vpop.permute.xlu0 %1421
        %vm1423 = vcmask 261120
        %v1424 = vsel %vm1423, %v1420, %v1422
        %v1425 = vrot.slane %v1376, 1
        %v1428 = vsel %vm995, %v1411, %v1420
        %v1431 = vsel %vm724, %v1424, %v1387
        %1432 = vrot.lane.b32.xlu0 %v1375, 32
        %v1433 = vpop.permute.xlu0 %1432
        %1434 = vrot.lane.b32.xlu0 %v1376, 32
        %v1435 = vpop.permute.xlu0 %1434
        %v1436 = vsel %vm1423, %v1433, %v1435
        %1437 = vrot.lane.b32.xlu0 %v1387, 96
        %v1438 = vpop.permute.xlu0 %1437
        %1439 = vrot.lane.b32.xlu0 %v1425, 96
        %v1440 = vpop.permute.xlu0 %1439
        %vm1441 = vcmask 785408
        %v1442 = vsel %vm1441, %v1438, %v1440
        %v1445 = vsel %vm995, %v1436, %v1383
        %v1448 = vsel %vm724, %v1418, %v1442
        %1449 = vrot.lane.b32.xlu0 %v1418, 96
        %v1450 = vpop.permute.xlu0 %1449
        %1451 = vrot.lane.b32.xlu0 %v1425, 64
        %v1452 = vpop.permute.xlu0 %1451
        %v1454 = vsel %vm995, %v1376, %v1450
        %v1456 = vsel %vm724, %v1450, %v1452
        %1457 = vrot.lane.b32.xlu0 %v1376, 96
        %v1458 = vpop.permute.xlu0 %1457
        %1459 = vrot.lane.b32.xlu0 %v1418, 64
        %v1460 = vpop.permute.xlu0 %1459
        %1461 = vrot.lane.b32.xlu0 %v1425, 32
        %v1462 = vpop.permute.xlu0 %1461
        %v1465 = vsel %vm995, %v1458, %v1460
        %v1467 = vsel %vm724, %v1460, %v1462
        %v1470 = vrot.slane %v1402, 4
        %v1471 = vrot.slane %v1404, 4
        %v1472 = vrot.slane %v1399, 4
        %v1475 = vrot.slane %v1445, 4
        %v1476 = vrot.slane %v1448, 4
        %v1477 = vrot.slane %v1440, 4
        %v1480 = vrot.slane %v1465, 4
        %v1481 = vrot.slane %v1467, 4
        %v1482 = vrot.slane %v1462, 4
        %v1484 = vsel %vm616, %v1391, %v1470
        %v1487 = vsel %vm616, %v1393, %v1471
        %v1490 = vsel %vm616, %v1389, %v1472
        %v1492 = vsel %vm616, %v1428, %v1475
        %v1495 = vsel %vm616, %v1431, %v1476
        %v1499 = vsel %vm616, %v1425, %v1477
        %v1501 = vsel %vm616, %v1454, %v1480
        %v1504 = vsel %vm616, %v1456, %v1481
        %v1507 = vsel %vm616, %v1452, %v1482
        %v1508 = vlaneseq
        %v1509 = vshrl.u32 %v1508, 7
        %v1510 = vsub.s32 0, %v1509
        %v1511 = vrot.slane %v336, %v1510
        %v1548 = vunpack.c.l.b16 %v293
        %v1549 = vunpack.c.l.b16 %v294
        %v1550 = vunpack.c.l.b16 %v295
        %v1551 = vunpack.c.l.b16 %v296
        %v1552 = vunpack.c.l.b16 %v297
        %v1553 = vunpack.c.l.b16 %v298
        %v1554 = vunpack.c.l.b16 %v299
        %v1555 = vunpack.c.l.b16 %v300
        %v1556 = vunpack.c.l.b16 %v301
        %v1557 = vunpack.c.l.b16 %v302
        %v1558 = vunpack.c.l.b16 %v303
        %v1559 = vunpack.c.l.b16 %v304
        %v1560 = vunpack.c.l.b16 %v305
        %v1561 = vunpack.c.l.b16 %v306
        %v1562 = vunpack.c.l.b16 %v307
        %v1563 = vunpack.c.l.b16 %v308
        %v1564 = vunpack.c.l.b16 %v309
        %v1565 = vunpack.c.l.b16 %v310
        %v1566 = vunpack.c.l.b16 %v311
        %v1567 = vunpack.c.l.b16 %v312
        %v1568 = vunpack.c.l.b16 %v313
        %v1569 = vunpack.c.l.b16 %v314
        %v1570 = vunpack.c.l.b16 %v315
        %v1571 = vunpack.c.l.b16 %v316
        %v1572 = vunpack.c.l.b16 %v317
        %v1573 = vunpack.c.l.b16 %v318
        %v1574 = vunpack.c.l.b16 %v319
        %v1575 = vunpack.c.l.b16 %v320
        %v1576 = vunpack.c.l.b16 %v321
        %v1577 = vunpack.c.l.b16 %v322
        %v1578 = vunpack.c.l.b16 %v323
        %v1579 = vunpack.c.l.b16 %v324
        %v1580 = vunpack.c.l.b16 %v325
        %v1581 = vunpack.c.l.b16 %v326
        %v1582 = vunpack.c.l.b16 %v327
        %v1583 = vunpack.c.l.b16 %v328
        %v1584 = vpack.c.b16 %v1549, %v1548
        %v1585 = vpack.c.b16 %v1551, %v1550
        %v1586 = vpack.c.b16 %v1553, %v1552
        %v1587 = vpack.c.b16 %v1555, %v1554
        %v1588 = vpack.c.b16 %v1557, %v1556
        %v1589 = vpack.c.b16 %v1559, %v1558
        %v1590 = vpack.c.b16 %v1561, %v1560
        %v1591 = vpack.c.b16 %v1563, %v1562
        %v1592 = vpack.c.b16 %v1565, %v1564
        %v1593 = vpack.c.b16 %v1567, %v1566
        %v1594 = vpack.c.b16 %v1569, %v1568
        %v1595 = vpack.c.b16 %v1571, %v1570
        %v1596 = vpack.c.b16 %v1573, %v1572
        %v1597 = vpack.c.b16 %v1575, %v1574
        %v1598 = vpack.c.b16 %v1577, %v1576
        %v1599 = vpack.c.b16 %v1579, %v1578
        %v1600 = vpack.c.b16 %v1581, %v1580
        %v1601 = vpack.c.b16 %v1583, %v1582
        %1621 = vrot.lane.b32.xlu0 %v1511, 96
        %v1622 = vpop.permute.xlu0 %1621
        %v1624 = vsel %vm719, %v1490, 0
        %v1626 = vsel %vm719, %v1499, 0
        %v1628 = vsel %vm719, %v1507, 0
        %1630 = vmatprep.subr.bf16.mxu0 0
        %1631 = vmatpush1.bf16.msra.mxu0 %v1584
        %1632 = vmatprep.subr.bf16.mxu0 0
        %1633 = vmatpush1.bf16.msra.mxu0 %v1585
        %1634 = vmatprep.subr.bf16.mxu0 0
        %1635 = vmatpush1.bf16.msra.mxu0 %v1586
        %1636 = vmatprep.subr.bf16.mxu0 0
        %1637 = vmatpush1.bf16.msra.mxu0 %v1587
        %1638 = vmatprep.subr.bf16.mxu0 0
        %1639 = vmatpush1.bf16.msra.mxu0 %v1588
        %1640 = vmatprep.subr.bf16.mxu0 0
        %1641 = vmatpush1.bf16.msra.mxu0 %v1589
        %1642 = vmatprep.subr.bf16.mxu0 0
        %1643 = vmatpush1.bf16.msra.mxu0 %v1590
        %1644 = vmatprep.subr.bf16.mxu0 0
        %1645 = vmatpush1.bf16.msra.mxu0 %v1591
        %1646 = vmatprep.subr.bf16.mxu0 0
        %1647 = vmatpush1.bf16.msra.mxu0 %v1592
        %1648 = vmatprep.subr.bf16.mxu0 0
        %1649 = vmatpush1.bf16.msra.mxu0 %v1593
        %1650 = vmatprep.subr.bf16.mxu0 0
        %1651 = vmatpush1.bf16.msra.mxu0 %v1594
        %1652 = vmatprep.subr.bf16.mxu0 0
        %1653 = vmatpush1.bf16.msra.mxu0 %v1595
        %1654 = vmatprep.subr.bf16.mxu0 0
        %1655 = vmatpush1.bf16.msra.mxu0 %v1596
        %1656 = vmatprep.subr.bf16.mxu0 0
        %1657 = vmatpush1.bf16.msra.mxu0 %v1597
        %1658 = vmatprep.subr.bf16.mxu0 0
        %1659 = vmatpush1.bf16.msra.mxu0 %v1598
        %1660 = vmatprep.subr.bf16.mxu0 0
        %1661 = vmatpush1.bf16.msra.mxu0 %v1599
        %1662 = vmatprep.mubr.bf16.mxu0 %v1487
        %1663 = vmatmul.mubr.bf16.gmra.mrb[0].mxu0 %v1484
        %v1664 = vpop.f32.mrb[0].mxu0
        %v1665 = vadd.f32 %v1622, %v1664
        %v1666 = vpop.f32.mrb[0].mxu0
        %v1667 = vpop.f32.mrb[0].mxu0
        %v1668 = vadd.f32 %v1622, %v1667
        %v1669 = vpop.f32.mrb[0].mxu0
        %1670 = vmatprep.mubr.bf16.mxu0 %v1495
        %1671 = vmatmul.mubr.bf16.gmra.mrb[0].mxu0 %v1492
        %v1672 = vpop.f32.mrb[0].mxu0
        %v1673 = vadd.f32 %v1622, %v1672
        %v1674 = vpop.f32.mrb[0].mxu0
        %v1675 = vpop.f32.mrb[0].mxu0
        %v1676 = vadd.f32 %v1622, %v1675
        %v1677 = vpop.f32.mrb[0].mxu0
        %1678 = vmatprep.mubr.bf16.mxu0 %v1504
        %1679 = vmatmul.mubr.bf16.gmra.mrb[0].mxu0 %v1501
        %v1680 = vpop.f32.mrb[0].mxu0
        %v1681 = vadd.f32 %v1622, %v1680
        %v1682 = vpop.f32.mrb[0].mxu0
        %v1683 = vpop.f32.mrb[0].mxu0
        %v1684 = vadd.f32 %v1622, %v1683
        %v1685 = vpop.f32.mrb[0].mxu0
        %1686 = vdwg.mxu0
        %1687 = vmatprep.subr.bf16.mxu0 0
        %1688 = vmatpush1.bf16.msra.mxu0 %v1600
        %1689 = vmatprep.subr.bf16.mxu0 0
        %1690 = vmatpush1.bf16.msra.mxu0 %v1601
        %1691 = vmatprep.subr.bf16.mxu0 0
        %1692 = vmatpush1.bf16.msra.mxu0 0
        %1693 = vmatprep.subr.bf16.mxu0 0
        %1694 = vmatpush1.bf16.msra.mxu0 0
        %1695 = vmatprep.subr.bf16.mxu0 0
        %1696 = vmatpush1.bf16.msra.mxu0 0
        %1697 = vmatprep.subr.bf16.mxu0 0
        %1698 = vmatpush1.bf16.msra.mxu0 0
        %1699 = vmatprep.subr.bf16.mxu0 0
        %1700 = vmatpush1.bf16.msra.mxu0 0
        %1701 = vmatprep.subr.bf16.mxu0 0
        %1702 = vmatpush1.bf16.msra.mxu0 0
        %1703 = vmatprep.subr.bf16.mxu0 0
        %1704 = vmatpush1.bf16.msra.mxu0 0
        %1705 = vmatprep.subr.bf16.mxu0 0
        %1706 = vmatpush1.bf16.msra.mxu0 0
        %1707 = vmatprep.subr.bf16.mxu0 0
        %1708 = vmatpush1.bf16.msra.mxu0 0
        %1709 = vmatprep.subr.bf16.mxu0 0
        %1710 = vmatpush1.bf16.msra.mxu0 0
        %1711 = vmatprep.subr.bf16.mxu0 0
        %1712 = vmatpush1.bf16.msra.mxu0 0
        %1713 = vmatprep.subr.bf16.mxu0 0
        %1714 = vmatpush1.bf16.msra.mxu0 0
        %1715 = vmatprep.subr.bf16.mxu0 0
        %1716 = vmatpush1.bf16.msra.mxu0 0
        %1717 = vmatprep.subr.bf16.mxu0 0
        %1718 = vmatpush1.bf16.msra.mxu0 0
        %1719 = vmatprep.mubr.bf16.mxu0 0
        %1720 = vmatmul.mubr.bf16.gmra.mrb[0].mxu0 %v1624
        %v1721 = vpop.f32.mrb[0].mxu0
        %v1722 = vadd.f32 %v1665, %v1721
        %v1723 = vpop.f32.mrb[0].mxu0
        %v1724 = vpop.f32.mrb[0].mxu0
        %v1725 = vadd.f32 %v1668, %v1724
        %v1726 = vpop.f32.mrb[0].mxu0
        %1727 = vmatprep.mubr.bf16.mxu0 0
        %1728 = vmatmul.mubr.bf16.gmra.mrb[0].mxu0 %v1626
        %v1729 = vpop.f32.mrb[0].mxu0
        %v1730 = vadd.f32 %v1673, %v1729
        %v1731 = vpop.f32.mrb[0].mxu0
        %v1732 = vpop.f32.mrb[0].mxu0
        %v1733 = vadd.f32 %v1676, %v1732
        %v1734 = vpop.f32.mrb[0].mxu0
        %1735 = vmatprep.mubr.bf16.mxu0 0
        %1736 = vmatmul.mubr.bf16.gmra.mrb[0].mxu0 %v1628
        %v1737 = vpop.f32.mrb[0].mxu0
        %v1738 = vadd.f32 %v1681, %v1737
        %v1739 = vpop.f32.mrb[0].mxu0
        %v1740 = vpop.f32.mrb[0].mxu0
        %v1741 = vadd.f32 %v1684, %v1740
        %v1742 = vpop.f32.mrb[0].mxu0
        %1743 = vdwg.mxu0
        %v1744 = vmax.f32 %v1722, 0.0
        %v1745 = vmax.f32 %v1725, 0.0
        %v1746 = vmax.f32 %v1730, 0.0
        %v1747 = vmax.f32 %v1733, 0.0
        %v1748 = vmax.f32 %v1738, 0.0
        %v1749 = vmax.f32 %v1741, 0.0
        %v1750 = vmax.f32 %v1744, %v1745
        %v1751 = vmax.f32 %v1750, %v1746
        %v1752 = vmax.f32 %v1747, %v1748
        %v1753 = vmax.f32 %v1752, %v1749
        %1755 = vrot.lane.b32.xlu0 %v1753, 32
        %v1756 = vpop.permute.xlu0 %1755
        %v1758 = vsel %vm719, %v1751, %v1756
        %v1760 = vrot.slane %v1758, 1
        %v1762 = vsel %vm673, %v1760, 0.0
        %v1763 = vrot.slane %v1758, 2
        %v1765 = vsel %vm683, %v1763, 0.0
        %v1766 = vmax.f32 %v1758, %v1762
        %v1767 = vmax.f32 %v1766, %v1765
        %v1769 = vrot.slane %v1767, 3
        %1770 = vrot.lane.b32.xlu0 %v1769, 64
        %v1771 = vpop.permute.xlu0 %1770
        %v1773 = vsel %vm724, %v1767, %v1771
        %v1774 = vpack.c.bf16 %v1773, %v1773
        %v1779 = vunpack.c.l.b16 %v329
        %v1780 = vunpack.c.l.b16 %v330
        %v1781 = vunpack.c.l.b16 %v331
        %v1782 = vunpack.c.l.b16 %v332
        %v1783 = vpack.c.b16 %v1780, %v1779
        %v1784 = vpack.c.b16 %v1782, %v1781
        %1785 = vrot.lane.b32.xlu0 %v429, 32
        %v1786 = vpop.permute.xlu0 %1785
        %1787 = vrot.lane.b32.xlu0 %v430, 32
        %v1788 = vpop.permute.xlu0 %1787
        %1789 = vrot.lane.b32.xlu0 %v431, 32
        %v1790 = vpop.permute.xlu0 %1789
        %1791 = vrot.lane.b32.xlu0 %v432, 32
        %v1792 = vpop.permute.xlu0 %1791
        %1793 = vrot.lane.b32.xlu0 %v433, 32
        %v1794 = vpop.permute.xlu0 %1793
        %1795 = vrot.lane.b32.xlu0 %v434, 32
        %v1796 = vpop.permute.xlu0 %1795
        %1797 = vrot.lane.b32.xlu0 %v1783, 32
        %v1798 = vpop.permute.xlu0 %1797
        %1799 = vrot.lane.b32.xlu0 %v1784, 32
        %v1800 = vpop.permute.xlu0 %1799
        %1810 = vrot.lane.b32.xlu0 %v338, 96
        %v1811 = vpop.permute.xlu0 %1810
        %1813 = vmatprep.subr.bf16.mxu0 0
        %1814 = vmatpush1.bf16.msra.mxu0 %v1786
        %1815 = vmatprep.subr.bf16.mxu0 0
        %1816 = vmatpush1.bf16.msra.mxu0 %v1788
        %1817 = vmatprep.subr.bf16.mxu0 0
        %1818 = vmatpush1.bf16.msra.mxu0 %v1790
        %1819 = vmatprep.subr.bf16.mxu0 0
        %1820 = vmatpush1.bf16.msra.mxu0 %v1792
        %1821 = vmatprep.subr.bf16.mxu0 0
        %1822 = vmatpush1.bf16.msra.mxu0 %v1794
        %1823 = vmatprep.subr.bf16.mxu0 0
        %1824 = vmatpush1.bf16.msra.mxu0 %v1796
        %1825 = vmatprep.subr.bf16.mxu0 0
        %1826 = vmatpush1.bf16.msra.mxu0 %v1798
        %1827 = vmatprep.subr.bf16.mxu0 0
        %1828 = vmatpush1.bf16.msra.mxu0 %v1800
        %1829 = vmatprep.subr.bf16.mxu0 0
        %1830 = vmatpush1.bf16.msra.mxu0 0
        %1831 = vmatprep.subr.bf16.mxu0 0
        %1832 = vmatpush1.bf16.msra.mxu0 0
        %1833 = vmatprep.subr.bf16.mxu0 0
        %1834 = vmatpush1.bf16.msra.mxu0 0
        %1835 = vmatprep.subr.bf16.mxu0 0
        %1836 = vmatpush1.bf16.msra.mxu0 0
        %1837 = vmatprep.subr.bf16.mxu0 0
        %1838 = vmatpush1.bf16.msra.mxu0 0
        %1839 = vmatprep.subr.bf16.mxu0 0
        %1840 = vmatpush1.bf16.msra.mxu0 0
        %1841 = vmatprep.subr.bf16.mxu0 0
        %1842 = vmatpush1.bf16.msra.mxu0 0
        %1843 = vmatprep.subr.bf16.mxu0 0
        %1844 = vmatpush1.bf16.msra.mxu0 0
        %1845 = vmatprep.mubr.bf16.mxu0 0
        %1846 = vmatmul.mubr.bf16.gmra.mrb[0].mxu0 %v1774
        %v1847 = vpop.f32.mrb[0].mxu0
        %v1848 = vadd.f32 %v1811, %v1847
        %v1849 = vpop.f32.mrb[0].mxu0
        %v1850 = vpop.f32.mrb[0].mxu0
        %v1851 = vpop.f32.mrb[0].mxu0
        %1852 = vdwg.mxu0
        %v1853 = vmax.f32 %v1848, 0.0
        %1855 = vrot.lane.b32.xlu0 %v340, 96
        %v1856 = vpop.permute.xlu0 %1855
        %v1858 = vmul.f32 %v1853, %v1856
        %vm1859 = vcmask 253952
        %v1860 = vsel %vm1859, %v1858, 0.0
        %1861 = vadd.xlane.f32.xlu0 %v1860
        %v1862 = vpop.xlane.xlu0 %1861
        %v1863 = vadd.f32 %v1862, %v342
        %v1864 = vxor.u32 %v1863, 2147483648
        %v1865 = vmul.f32 %v1864, 1.442695
        %v1866 = vpow.pop %v1865
        %v1867 = vadd.f32 %v1866, 1.0
        %v1868 = vrcp.pop %v1867
        %v1869 = vmul.f32 1.0, %v1868
        %v1870 = vsel %vm460, %v1869, 0.0
        %1872 = vset.pattern.permute.xlu0 32
        %1873 = vperm.xlu0 %1872, %v1870
        %v1874 = vpop.permute.xlu0 %1873
        %1876 = vst [vmem:[%s278] sm:$0xff] %v1874
        %s1877 = sand.u32 %s127, 1
        %s1878 = scalar_lea.sflag [#allocation4], %s1877
        %s1879 = sand.u32 %s127, 1
        %s1880 = smul.addr %s1879, 8
        %s1881 = scalar_lea.vmem [#allocation10], %s1880
        // Predicated region
        $region53: #{tpu_custom_call.1} parent=35 // pred_check
          %p1882 = pneg %p137
        $region54: #{tpu_custom_call.1} parent=35 // pred_check_branch
          %1884 = sbr.rel (%p1882) target = $region56
        $region55: #{tpu_custom_call.1} parent=35 // pred_region
          %s1886 = ssub.s32 128, 128
          %1887 = vsyncadd %s1878, %s1886
          %s1888 = smul.addr %s25, 128
          %s1889 = scalar_lea.hbm %s4, %s1888
          %s1891 = sshll.u32 %s1881, 4
          %s1892 = int_to_ptr.vmem [resolvable:$true] %s1891
          %1894 = dma.vmem_to_hbm [thread:$0]  %s1892, 128, %s1889, %s1878
        $region56: #{tpu_custom_call.1} parent=35 // pred_fallthru
          _
      $region36: #{tpu_custom_call.1} parent=5 // pred_fallthru
        _
      %p1895 = scmp.le.s32.totalorder 2, %s20
      // Predicated region
      $region57: #{tpu_custom_call.1} parent=5 // pred_check
        %p1896 = pneg %p1895
      $region58: #{tpu_custom_call.1} parent=5 // pred_check_branch
        %1898 = sbr.rel (%p1896) target = $region60
      $region59: #{tpu_custom_call.1} parent=5 // pred_region
        %s1899 = ssub.s32 %s20, 2
        // Predicated region
        $region61: #{tpu_custom_call.1} parent=59 // pred_check
          %p1900 = pneg %p143
        $region62: #{tpu_custom_call.1} parent=59 // pred_check_branch
          %1902 = sbr.rel (%p1900) target = $region64
        $region63: #{tpu_custom_call.1} parent=59 // pred_region
          %s1903 = sand.u32 %s128, 1
          %s1904 = scalar_lea.sflag [#allocation4], %s1903
          %s1905 = sand.u32 %s128, 1
          %s1906 = smul.addr %s1905, 8
          %s1907 = scalar_lea.vmem [#allocation10], %s1906
          %1908 = dma.done %s1904, 128
        $region64: #{tpu_custom_call.1} parent=59 // pred_fallthru
          _
      $region60: #{tpu_custom_call.1} parent=5 // pred_fallthru
        _
    $region6: #{tpu_custom_call.1} parent=1 // loop_footer
      %s24 = sadd.s32 1, %s20
    $region7: #{tpu_custom_call.1} parent=1 // loop_footer_branch
      %19 = sbr.rel target = $region3
    $region8: #{tpu_custom_call.1} parent=1 // loop_exit
      _
    %1909 = vsyncpa [#allocation3], 1
    %s1910 = scalar_lea.sflag [#allocation3], 1
    %1911 = vsyncpa %s1910, 1
    %1912 = vsyncpa [#allocation6], 1
    %s1913 = scalar_lea.sflag [#allocation6], 1
    %1914 = vsyncpa %s1913, 1
    %1915 = vsyncpa [#allocation9], 1
    %1916 = vsyncpa [#allocation4], 1
    %s1917 = scalar_lea.sflag [#allocation4], 1
    %1918 = vsyncpa %s1917, 1

</llo_original>
